<compile_context>
chip_gen: v6e
topology: v6e:2x2x1
jax: 0.10.0
libtpu: 0.0.40
codegen_flags: <defaults>
</compile_context>

<pallas_src>
import functools
import math

import jax
import jax.numpy as jnp
from jax.experimental import pallas as pl
from jax.experimental.pallas import tpu as pltpu


def _round_up(x, m):
    return ((x + m - 1) // m) * m


def _quantile_kernel(state_ref, tau_ref, w1a_ref, b1a_ref, w1b_ref, b1b_ref,
                     w2a_ref, b2a_ref, w2b_ref, b2b_ref, o_ref, *,
                     inv_num_actions):
    # state_ref: (1, 1, E) f32      tau_ref: (1, TN, E) f32
    # w1a/w1b:   (E, H)   bf16      b1a/b1b: (1, H)     f32
    # w2a:       (H, A_pad) bf16    b2a:     (1, A_pad) f32 (padded cols = 0)
    # w2b:       (H, 128) bf16 (only col 0 non-zero)    b2b: (1, 1) f32
    # o_ref:     (1, TN, A_pad) f32
    emb = (state_ref[0] * tau_ref[0]).astype(jnp.bfloat16)            # (TN, E)

    # Advantage branch: Linear(E->H) + ReLU + Linear(H->A)
    h_a = jnp.dot(emb, w1a_ref[...], preferred_element_type=jnp.float32)
    h_a = jnp.maximum(h_a + b1a_ref[...], 0.0).astype(jnp.bfloat16)   # (TN, H)
    adv = jnp.dot(h_a, w2a_ref[...], preferred_element_type=jnp.float32)
    adv = adv + b2a_ref[...]                                          # (TN, A_pad)

    # Baseline branch: Linear(E->H) + ReLU + Linear(H->1)
    h_b = jnp.dot(emb, w1b_ref[...], preferred_element_type=jnp.float32)
    h_b = jnp.maximum(h_b + b1b_ref[...], 0.0).astype(jnp.bfloat16)   # (TN, H)
    base = jnp.dot(h_b, w2b_ref[...], preferred_element_type=jnp.float32)
    base = base[:, :1] + b2b_ref[...]                                 # (TN, 1)

    # Dueling combine. Padded action columns of adv are exactly 0 (zero weight
    # and bias), so summing the padded row equals summing the real actions.
    mean_adv = jnp.sum(adv, axis=-1, keepdims=True) * inv_num_actions
    o_ref[0] = base + adv - mean_adv


def quantile_network_forward(state_embeddings, tau_embeddings, params,
                             num_actions):
    """state_embeddings: (B, E) f32. tau_embeddings: (B, N, E) f32.
    params: dict of effective NoisyLinear weights (already transposed (in,out)).
    Returns quantiles of shape (B, N, num_actions), f32."""
    B, E = state_embeddings.shape
    Bt, N, Et = tau_embeddings.shape
    assert Bt == B and Et == E
    H = params["w1a"].shape[1]
    A = int(num_actions)

    A_pad = _round_up(A, 128)               # lane-dense output stores
    TN = min(256, _round_up(N, 8))          # row tile (multiple of 8 sublanes)
    N_pad = _round_up(N, TN)

    state3 = state_embeddings.reshape(B, 1, E).astype(jnp.float32)
    tau_p = tau_embeddings.astype(jnp.float32)
    if N_pad != N:
        tau_p = jnp.pad(tau_p, ((0, 0), (0, N_pad - N), (0, 0)))

    # bf16 weights (halves VMEM/DMA bytes, native MXU dtype); f32 biases.
    w1a = params["w1a"].astype(jnp.bfloat16)                         # (E, H)
    w1b = params["w1b"].astype(jnp.bfloat16)                         # (E, H)
    w2a = jnp.pad(params["w2a"], ((0, 0), (0, A_pad - A))).astype(jnp.bfloat16)
    w2b = jnp.pad(params["w2b"], ((0, 0), (0, 128 - 1))).astype(jnp.bfloat16)
    b1a = params["b1a"].reshape(1, H).astype(jnp.float32)
    b1b = params["b1b"].reshape(1, H).astype(jnp.float32)
    b2a = jnp.pad(params["b2a"], (0, A_pad - A)).reshape(1, A_pad).astype(jnp.float32)
    b2b = params["b2b"].reshape(1, 1).astype(jnp.float32)

    grid = (B, N_pad // TN)
    m_pad = B * N_pad

    # Advisory cost estimate for the XLA scheduler.
    flops = 2 * m_pad * E * H * 2 + 2 * m_pad * H * (A_pad + 128)
    bytes_accessed = (
        state3.size * 4 + tau_p.size * 4
        + (w1a.size + w1b.size + w2a.size + w2b.size) * 2
        + (b1a.size + b1b.size + b2a.size + b2b.size) * 4
        + B * N_pad * A_pad * 4)
    cost = pl.CostEstimate(flops=flops, transcendentals=0,
                           bytes_accessed=bytes_accessed)

    # Explicit VMEM budget: pipelined blocks (double-buffered) + resident
    # weights + in-kernel temporaries, with margin; capped at v7x physical.
    vmem_est = (
        2 * TN * E * 4 + 2 * TN * A_pad * 4 + 2 * E * 4
        + 2 * (E * H) * 2 + (H * A_pad + H * 128) * 2
        + (2 * H + A_pad + 1) * 4
        + TN * (2 * H + A_pad + 128 + 2 * E) * 4)
    vmem_limit = int(min(64 * 1024 * 1024,
                         max(32 * 1024 * 1024, 2 * vmem_est)))

    out = pl.pallas_call(
        functools.partial(_quantile_kernel, inv_num_actions=1.0 / A),
        out_shape=jax.ShapeDtypeStruct((B, N_pad, A_pad), jnp.float32),
        grid=grid,
        in_specs=[
            pl.BlockSpec((1, 1, E), lambda b, j: (b, 0, 0)),       # state
            pl.BlockSpec((1, TN, E), lambda b, j: (b, j, 0)),      # tau
            pl.BlockSpec((E, H), lambda b, j: (0, 0)),             # w1a (resident)
            pl.BlockSpec((1, H), lambda b, j: (0, 0)),             # b1a
            pl.BlockSpec((E, H), lambda b, j: (0, 0)),             # w1b
            pl.BlockSpec((1, H), lambda b, j: (0, 0)),             # b1b
            pl.BlockSpec((H, A_pad), lambda b, j: (0, 0)),         # w2a
            pl.BlockSpec((1, A_pad), lambda b, j: (0, 0)),         # b2a
            pl.BlockSpec((H, 128), lambda b, j: (0, 0)),           # w2b
            pl.BlockSpec((1, 1), lambda b, j: (0, 0)),             # b2b
        ],
        out_specs=pl.BlockSpec((1, TN, A_pad), lambda b, j: (b, j, 0)),
        compiler_params=pltpu.CompilerParams(
            dimension_semantics=("parallel", "parallel"),
            vmem_limit_bytes=vmem_limit),
        cost_estimate=cost,
    )(state3, tau_p, w1a, b1a, w1b, b1b, w2a, b2a, w2b, b2b)

    return out[:, :N, :A]


# ----------------------------------------------------------------------------
# NoisyFactorizedLinear effective-parameter preparation (plain JAX glue).
# ----------------------------------------------------------------------------
def _sqrt_with_sign(x):
    return jnp.sign(x) * jnp.sqrt(jnp.abs(x))


def make_noisy_linear_params(key, in_features, out_features, sigma_zero=0.4):
    """Deterministic init mimicking NoisyFactorizedLinear + one noise sample.
    Returns (w_eff_t, b_eff) with w_eff_t of shape (in, out)."""
    kw, kb, kin, kout = jax.random.split(key, 4)
    bound = 1.0 / math.sqrt(in_features)
    weight = jax.random.uniform(kw, (out_features, in_features),
                                minval=-bound, maxval=bound, dtype=jnp.float32)
    bias = jax.random.uniform(kb, (out_features,),
                              minval=-bound, maxval=bound, dtype=jnp.float32)
    sigma_init = sigma_zero / math.sqrt(in_features)
    sigma_weight = jnp.full((out_features, in_features), sigma_init, jnp.float32)
    sigma_bias = jnp.full((out_features,), sigma_init, jnp.float32)

    eps_in = _sqrt_with_sign(jax.random.normal(kin, (1, in_features), jnp.float32))
    eps_out = _sqrt_with_sign(jax.random.normal(kout, (out_features, 1), jnp.float32))

    noise_v = eps_in * eps_out                           # (out, in)
    w_eff = weight + sigma_weight * noise_v              # (out, in)
    b_eff = bias + sigma_bias * eps_out[:, 0]            # (out,)
    return w_eff.T, b_eff                                # (in, out), (out,)


def reference_forward(state_embeddings, tau_embeddings, p, num_actions):
    """Pure-JAX reference mirroring the kernel's bf16-input / f32-accum math."""
    B, N, E = tau_embeddings.shape
    bf = lambda x: x.astype(jnp.bfloat16).astype(jnp.float32)
    dot = functools.partial(jnp.dot, precision=jax.lax.Precision.HIGHEST)

    emb = bf(state_embeddings[:, None, :] * tau_embeddings).reshape(B * N, E)
    h_a = jnp.maximum(dot(emb, bf(p["w1a"])) + p["b1a"], 0.0)
    adv = dot(bf(h_a), bf(p["w2a"])) + p["b2a"]
    h_b = jnp.maximum(dot(emb, bf(p["w1b"])) + p["b1b"], 0.0)
    base = dot(bf(h_b), bf(p["w2b"])) + p["b2b"]
    q = base + adv - adv.mean(axis=1, keepdims=True)
    return q.reshape(B, N, num_actions)


if __name__ == "__main__":
    key = jax.random.PRNGKey(0)
    k_state, k_tau, k1, k2, k3, k4 = jax.random.split(key, 6)

    batch, n_taus = 2, 8
    embedding_dim = 32
    num_actions = 4
    hidden = 512  # fixed hidden width in the PyTorch module

    state_embeddings = jax.random.normal(
        k_state, (batch, embedding_dim), dtype=jnp.float32)
    tau_embeddings = jax.random.normal(
        k_tau, (batch, n_taus, embedding_dim), dtype=jnp.float32)

    w1a, b1a = make_noisy_linear_params(k1, embedding_dim, hidden)
    w2a, b2a = make_noisy_linear_params(k2, hidden, num_actions)
    w1b, b1b = make_noisy_linear_params(k3, embedding_dim, hidden)
    w2b, b2b = make_noisy_linear_params(k4, hidden, 1)
    params = dict(w1a=w1a, b1a=b1a, w2a=w2a, b2a=b2a,
                  w1b=w1b, b1b=b1b, w2b=w2b, b2b=b2b)

    out = quantile_network_forward(state_embeddings, tau_embeddings, params,
                                   num_actions)
    out = jax.block_until_ready(out)

    ref = reference_forward(state_embeddings, tau_embeddings, params,
                            num_actions)
    assert out.shape == (batch, n_taus, num_actions)
    assert jnp.allclose(out, ref, atol=1e-2, rtol=1e-2), "mismatch vs reference"

    print("KERNEL_OK")
</pallas_src>

<mosaic_0001>
module attributes {stable_mosaic.version = 11 : i64} {
  func.func @_quantile_kernel(%arg0: i32, %arg1: i32, %arg2: memref<1x1x32xf32, #tpu.memory_space<vmem>>, %arg3: memref<1x8x32xf32, #tpu.memory_space<vmem>>, %arg4: memref<32x512xbf16, #tpu.memory_space<vmem>>, %arg5: memref<1x512xf32, #tpu.memory_space<vmem>>, %arg6: memref<32x512xbf16, #tpu.memory_space<vmem>>, %arg7: memref<1x512xf32, #tpu.memory_space<vmem>>, %arg8: memref<512x128xbf16, #tpu.memory_space<vmem>>, %arg9: memref<1x128xf32, #tpu.memory_space<vmem>>, %arg10: memref<512x128xbf16, #tpu.memory_space<vmem>>, %arg11: memref<1x1xf32, #tpu.memory_space<vmem>>, %arg12: memref<1x8x128xf32, #tpu.memory_space<vmem>>) attributes {dimension_semantics = [#tpu.dimension_semantics<parallel>, #tpu.dimension_semantics<parallel>], iteration_bounds = array<i64: 2, 1>, scalar_prefetch = 0 : i64, scratch_operands = 0 : i64, tpu.core_type = #tpu.core_type<tc>, window_params = [{transform_indices = @transform_0, window_bounds = array<i64: 1, 1, 32>}, {transform_indices = @transform_1, window_bounds = array<i64: 1, 8, 32>}, {pipeline_mode = #tpu.pipeline_mode<synchronous>, transform_indices = @transform_2, window_bounds = array<i64: 32, 512>}, {pipeline_mode = #tpu.pipeline_mode<synchronous>, transform_indices = @transform_3, window_bounds = array<i64: 1, 512>}, {pipeline_mode = #tpu.pipeline_mode<synchronous>, transform_indices = @transform_4, window_bounds = array<i64: 32, 512>}, {pipeline_mode = #tpu.pipeline_mode<synchronous>, transform_indices = @transform_5, window_bounds = array<i64: 1, 512>}, {pipeline_mode = #tpu.pipeline_mode<synchronous>, transform_indices = @transform_6, window_bounds = array<i64: 512, 128>}, {pipeline_mode = #tpu.pipeline_mode<synchronous>, transform_indices = @transform_7, window_bounds = array<i64: 1, 128>}, {pipeline_mode = #tpu.pipeline_mode<synchronous>, transform_indices = @transform_8, window_bounds = array<i64: 512, 128>}, {pipeline_mode = #tpu.pipeline_mode<synchronous>, transform_indices = @transform_9, window_bounds = array<i64: 1, 1>}, {transform_indices = @transform_10, window_bounds = array<i64: 1, 8, 128>}]} {
    %c0 = arith.constant 0 : index
    %c0_0 = arith.constant 0 : index
    %c0_1 = arith.constant 0 : index
    %0 = vector.load %arg2[%c0, %c0_0, %c0_1] : memref<1x1x32xf32, #tpu.memory_space<vmem>>, vector<1x1x32xf32>
    %1 = vector.shape_cast %0 : vector<1x1x32xf32> to vector<1x32xf32>
    %c0_2 = arith.constant 0 : index
    %c0_3 = arith.constant 0 : index
    %c0_4 = arith.constant 0 : index
    %2 = vector.load %arg3[%c0_2, %c0_3, %c0_4] : memref<1x8x32xf32, #tpu.memory_space<vmem>>, vector<1x8x32xf32>
    %3 = vector.shape_cast %2 : vector<1x8x32xf32> to vector<8x32xf32>
    %4 = vector.broadcast %1 : vector<1x32xf32> to vector<8x32xf32>
    %5 = arith.mulf %4, %3 : vector<8x32xf32>
    %6 = arith.truncf %5 : vector<8x32xf32> to vector<8x32xbf16>
    %c0_5 = arith.constant 0 : index
    %c0_6 = arith.constant 0 : index
    %7 = vector.load %arg4[%c0_5, %c0_6] : memref<32x512xbf16, #tpu.memory_space<vmem>>, vector<32x512xbf16>
    %cst = arith.constant dense<0.000000e+00> : vector<8x512xf32>
    %8 = tpu.matmul %6, %7, %cst {dimension_numbers = #tpu.dot_dimension_numbers<[1], [0], [0], [1], [0, 0, 1, 1], [], []>} : vector<8x32xbf16>, vector<32x512xbf16>, vector<8x512xf32> -> vector<8x512xf32>
    %c0_7 = arith.constant 0 : index
    %c0_8 = arith.constant 0 : index
    %9 = vector.load %arg5[%c0_7, %c0_8] : memref<1x512xf32, #tpu.memory_space<vmem>>, vector<1x512xf32>
    %10 = vector.broadcast %9 : vector<1x512xf32> to vector<8x512xf32>
    %11 = arith.addf %8, %10 : vector<8x512xf32>
    %cst_9 = arith.constant 0.000000e+00 : f32
    %12 = vector.broadcast %cst_9 : f32 to vector<8x512xf32>
    %13 = arith.maximumf %11, %12 : vector<8x512xf32>
    %14 = arith.truncf %13 : vector<8x512xf32> to vector<8x512xbf16>
    %c0_10 = arith.constant 0 : index
    %c0_11 = arith.constant 0 : index
    %15 = vector.load %arg8[%c0_10, %c0_11] : memref<512x128xbf16, #tpu.memory_space<vmem>>, vector<512x128xbf16>
    %cst_12 = arith.constant dense<0.000000e+00> : vector<8x128xf32>
    %16 = tpu.matmul %14, %15, %cst_12 {dimension_numbers = #tpu.dot_dimension_numbers<[1], [0], [0], [1], [0, 0, 1, 1], [], []>} : vector<8x512xbf16>, vector<512x128xbf16>, vector<8x128xf32> -> vector<8x128xf32>
    %c0_13 = arith.constant 0 : index
    %c0_14 = arith.constant 0 : index
    %17 = vector.load %arg9[%c0_13, %c0_14] : memref<1x128xf32, #tpu.memory_space<vmem>>, vector<1x128xf32>
    %18 = vector.broadcast %17 : vector<1x128xf32> to vector<8x128xf32>
    %19 = arith.addf %16, %18 : vector<8x128xf32>
    %c0_15 = arith.constant 0 : index
    %c0_16 = arith.constant 0 : index
    %20 = vector.load %arg6[%c0_15, %c0_16] : memref<32x512xbf16, #tpu.memory_space<vmem>>, vector<32x512xbf16>
    %cst_17 = arith.constant dense<0.000000e+00> : vector<8x512xf32>
    %21 = tpu.matmul %6, %20, %cst_17 {dimension_numbers = #tpu.dot_dimension_numbers<[1], [0], [0], [1], [0, 0, 1, 1], [], []>} : vector<8x32xbf16>, vector<32x512xbf16>, vector<8x512xf32> -> vector<8x512xf32>
    %c0_18 = arith.constant 0 : index
    %c0_19 = arith.constant 0 : index
    %22 = vector.load %arg7[%c0_18, %c0_19] : memref<1x512xf32, #tpu.memory_space<vmem>>, vector<1x512xf32>
    %23 = vector.broadcast %22 : vector<1x512xf32> to vector<8x512xf32>
    %24 = arith.addf %21, %23 : vector<8x512xf32>
    %cst_20 = arith.constant 0.000000e+00 : f32
    %25 = vector.broadcast %cst_20 : f32 to vector<8x512xf32>
    %26 = arith.maximumf %24, %25 : vector<8x512xf32>
    %27 = arith.truncf %26 : vector<8x512xf32> to vector<8x512xbf16>
    %c0_21 = arith.constant 0 : index
    %c0_22 = arith.constant 0 : index
    %28 = vector.load %arg10[%c0_21, %c0_22] : memref<512x128xbf16, #tpu.memory_space<vmem>>, vector<512x128xbf16>
    %cst_23 = arith.constant dense<0.000000e+00> : vector<8x128xf32>
    %29 = tpu.matmul %27, %28, %cst_23 {dimension_numbers = #tpu.dot_dimension_numbers<[1], [0], [0], [1], [0, 0, 1, 1], [], []>} : vector<8x512xbf16>, vector<512x128xbf16>, vector<8x128xf32> -> vector<8x128xf32>
    %30 = vector.extract_strided_slice %29 {offsets = [0, 0], sizes = [8, 1], strides = [1, 1]} : vector<8x128xf32> to vector<8x1xf32>
    %c0_24 = arith.constant 0 : index
    %c0_25 = arith.constant 0 : index
    %31 = vector.load %arg11[%c0_24, %c0_25] : memref<1x1xf32, #tpu.memory_space<vmem>>, vector<1x1xf32>
    %32 = vector.broadcast %31 : vector<1x1xf32> to vector<8x1xf32>
    %33 = arith.addf %30, %32 : vector<8x1xf32>
    %cst_26 = arith.constant dense<0.000000e+00> : vector<8xf32>
    %34 = vector.multi_reduction <add>, %19, %cst_26 [1] : vector<8x128xf32> to vector<8xf32>
    %35 = vector.shape_cast %34 : vector<8xf32> to vector<8x1xf32>
    %cst_27 = arith.constant 2.500000e-01 : f32
    %36 = vector.broadcast %cst_27 : f32 to vector<8x1xf32>
    %37 = arith.mulf %35, %36 : vector<8x1xf32>
    %38 = vector.broadcast %33 : vector<8x1xf32> to vector<8x128xf32>
    %39 = arith.addf %38, %19 : vector<8x128xf32>
    %40 = vector.broadcast %37 : vector<8x1xf32> to vector<8x128xf32>
    %41 = arith.subf %39, %40 : vector<8x128xf32>
    %c0_28 = arith.constant 0 : index
    %c0_29 = arith.constant 0 : index
    %c0_30 = arith.constant 0 : index
    %42 = vector.load %arg12[%c0_28, %c0_29, %c0_30] : memref<1x8x128xf32, #tpu.memory_space<vmem>>, vector<1x8x128xf32>
    %43 = vector.shape_cast %42 : vector<1x8x128xf32> to vector<8x128xf32>
    %44 = vector.shape_cast %41 : vector<8x128xf32> to vector<1x8x128xf32>
    tpu.vector_store %arg12[%c0_28, %c0_29, %c0_30], %44 {strides = array<i32>} : memref<1x8x128xf32, #tpu.memory_space<vmem>>, vector<1x8x128xf32>,
    return
  }
  func.func @transform_0(%arg0: i32, %arg1: i32) -> (i32, i32, i32) {
    %c0_i32 = arith.constant 0 : i32
    %c0_i32_0 = arith.constant 0 : i32
    %c0_i32_1 = arith.constant 0 : i32
    return %arg0, %c0_i32, %c0_i32_0 : i32, i32, i32
  }
  func.func @transform_1(%arg0: i32, %arg1: i32) -> (i32, i32, i32) {
    %c0_i32 = arith.constant 0 : i32
    %c0_i32_0 = arith.constant 0 : i32
    return %arg0, %arg1, %c0_i32 : i32, i32, i32
  }
  func.func @transform_2(%arg0: i32, %arg1: i32) -> (i32, i32) {
    %c0_i32 = arith.constant 0 : i32
    %c0_i32_0 = arith.constant 0 : i32
    %c0_i32_1 = arith.constant 0 : i32
    return %c0_i32, %c0_i32_0 : i32, i32
  }
  func.func @transform_3(%arg0: i32, %arg1: i32) -> (i32, i32) {
    %c0_i32 = arith.constant 0 : i32
    %c0_i32_0 = arith.constant 0 : i32
    %c0_i32_1 = arith.constant 0 : i32
    return %c0_i32, %c0_i32_0 : i32, i32
  }
  func.func @transform_4(%arg0: i32, %arg1: i32) -> (i32, i32) {
    %c0_i32 = arith.constant 0 : i32
    %c0_i32_0 = arith.constant 0 : i32
    %c0_i32_1 = arith.constant 0 : i32
    return %c0_i32, %c0_i32_0 : i32, i32
  }
  func.func @transform_5(%arg0: i32, %arg1: i32) -> (i32, i32) {
    %c0_i32 = arith.constant 0 : i32
    %c0_i32_0 = arith.constant 0 : i32
    %c0_i32_1 = arith.constant 0 : i32
    return %c0_i32, %c0_i32_0 : i32, i32
  }
  func.func @transform_6(%arg0: i32, %arg1: i32) -> (i32, i32) {
    %c0_i32 = arith.constant 0 : i32
    %c0_i32_0 = arith.constant 0 : i32
    %c0_i32_1 = arith.constant 0 : i32
    return %c0_i32, %c0_i32_0 : i32, i32
  }
  func.func @transform_7(%arg0: i32, %arg1: i32) -> (i32, i32) {
    %c0_i32 = arith.constant 0 : i32
    %c0_i32_0 = arith.constant 0 : i32
    %c0_i32_1 = arith.constant 0 : i32
    return %c0_i32, %c0_i32_0 : i32, i32
  }
  func.func @transform_8(%arg0: i32, %arg1: i32) -> (i32, i32) {
    %c0_i32 = arith.constant 0 : i32
    %c0_i32_0 = arith.constant 0 : i32
    %c0_i32_1 = arith.constant 0 : i32
    return %c0_i32, %c0_i32_0 : i32, i32
  }
  func.func @transform_9(%arg0: i32, %arg1: i32) -> (i32, i32) {
    %c0_i32 = arith.constant 0 : i32
    %c0_i32_0 = arith.constant 0 : i32
    %c0_i32_1 = arith.constant 0 : i32
    return %c0_i32, %c0_i32_0 : i32, i32
  }
  func.func @transform_10(%arg0: i32, %arg1: i32) -> (i32, i32, i32) {
    %c0_i32 = arith.constant 0 : i32
    %c0_i32_0 = arith.constant 0 : i32
    return %arg0, %arg1, %c0_i32 : i32, i32, i32
  }
}

</mosaic_0001>

<llo_original>
// kernel: tpu_custom_call.1
$region0: #{tpu_custom_call.1}
  #allocation0 [shape = 'u32[]', space=smem, size = 0x4, offset = 0x4, fixed_abs, tag = 'smem constant byte address 0x4 - core index']
  #allocation1 [shape = 'u32[144,128]{1,0:T(1,128)}', space=vmem, size = 0x12000, scoped, tag = 'internal scratch']
  #allocation2 [shape = 'f32[1,1]{1,0:T(1,128)S(1)}', space=vmem, size = 0x200, scoped, tag = 'scoped memory for tpu_custom_call.1']
  %s0 = inlined_call_operand.hbm [shape: f32[2,1,32], index: 0, kind: input, shape index: {}]
  %s1 = inlined_call_operand.hbm [shape: f32[2,8,32], index: 1, kind: input, shape index: {}]
  %s2 = inlined_call_operand.hbm [shape: bf16[32,512], index: 2, kind: input, shape index: {}]
  %s3 = inlined_call_operand.vmem [shape: f32[1,512], index: 3, kind: input, shape index: {}]
  %s4 = inlined_call_operand.hbm [shape: bf16[32,512], index: 4, kind: input, shape index: {}]
  %s5 = inlined_call_operand.vmem [shape: f32[1,512], index: 5, kind: input, shape index: {}]
  %s6 = inlined_call_operand.hbm [shape: bf16[512,128], index: 6, kind: input, shape index: {}]
  %s7 = inlined_call_operand.vmem [shape: f32[1,128], index: 7, kind: input, shape index: {}]
  %s8 = inlined_call_operand.hbm [shape: bf16[512,128], index: 8, kind: input, shape index: {}]
  %s9 = inlined_call_operand.<no memory space> [shape: f32[1,1], index: 9, kind: input, shape index: {}]
  %s10 = inlined_call_operand.hbm [shape: f32[2,8,128], index: 10, kind: output, shape index: {}]
  %s11 = sld [smem:[#allocation0]]
  $region97: #{tpu_custom_call.1} parent=0
    _
  %s13 = ssub.s32 1, %s11
  %s14 = scalar_select 0, %s13, %s11
  %v15 = vstv %s9
  %16 = vst [vmem:[#allocation2] sm:$0x1] %v15
  $region1: #{tpu_custom_call.1} parent=0
    #allocation3 [shape = 'u8[1024]{0}', space=vmem, size = 0x400, scoped, tag = 'input window, operand 0']
    #allocation4 [shape = 's32[2]{0}', space=sflag, size = 0x8, scoped, tag = 'scoped memory for tpu_custom_call.1']
    #allocation5 [shape = 's32[2]{0}', space=sflag, size = 0x8, scoped, tag = 'scoped memory for tpu_custom_call.1']
    #allocation6 [shape = 'u8[8192]{0}', space=vmem, size = 0x2000, scoped, tag = 'input window, operand 1']
    #allocation7 [shape = 's32[2]{0}', space=sflag, size = 0x8, scoped, tag = 'scoped memory for tpu_custom_call.1']
    #allocation8 [shape = 'u8[32768]{0}', space=vmem, size = 0x8000, scoped, tag = 'input window, operand 2, single buffered']
    #allocation9 [shape = 'u8[32768]{0}', space=vmem, size = 0x8000, scoped, tag = 'input window, operand 4, single buffered']
    #allocation10 [shape = 's32[1]{0}', space=sflag, size = 0x4, scoped, tag = 'scoped memory for tpu_custom_call.1']
    #allocation11 [shape = 'u8[131072]{0}', space=vmem, size = 0x20000, scoped, tag = 'input window, operand 6, single buffered']
    #allocation12 [shape = 'u8[131072]{0}', space=vmem, size = 0x20000, scoped, tag = 'input window, operand 8, single buffered']
    #allocation13 [shape = 's32[1]{0}', space=sflag, size = 0x4, scoped, tag = 'scoped memory for tpu_custom_call.1']
    #allocation14 [shape = 'u8[8192]{0}', space=vmem, size = 0x2000, scoped, tag = 'output window, operand 0']
    %17 = vsyncpa [#allocation4], 0
    %s18 = scalar_lea.sflag [#allocation4], 1
    %19 = vsyncpa %s18, 0
    %20 = vsyncpa [#allocation7], 0
    %s21 = scalar_lea.sflag [#allocation7], 1
    %22 = vsyncpa %s21, 0
    %23 = vsyncpa [#allocation10], 0
    %24 = vsyncpa [#allocation13], 0
    %25 = vsyncpa [#allocation5], 0
    %s26 = scalar_lea.sflag [#allocation5], 1
    %27 = vsyncpa %s26, 0
    loop: start=0, step=1, limit=4
    $region2: #{tpu_custom_call.1} parent=1 // loop_pre_header
      _
    $region3: #{tpu_custom_call.1} parent=1 // loop_header
      %s29 = sphi 0, %s33
      %p30 = scmp.ge.s32.totalorder %s29, 4
      %s36 = sphi 0, %s48
      %s37 = sphi 0, %s44
      %s38 = sphi 0, %s36
      %s39 = sphi 0, %s37
      %s40 = sphi 0, %s38
      %s41 = sphi 0, %s39
      %s51 = sphi 0, %s53
      %s54 = sphi 0, %s51
      %s55 = sphi 0, %s54
      %s71 = sphi 0, %s55
      %s79 = sphi 0, %s81
      %s82 = sphi 0, %s79
      %s83 = sphi 0, %s82
      %s99 = sphi 0, %s83
      %s103 = sphi 0, %s103
      %s105 = sphi 0, %s103
      %s106 = sphi 0, %s105
      %s120 = sphi 0, %s106
      %s124 = sphi 0, %s124
      %s126 = sphi 0, %s124
      %s127 = sphi 0, %s126
      %s141 = sphi 0, %s127
      %s145 = sphi 0, %s145
      %s147 = sphi 0, %s145
      %s148 = sphi 0, %s147
      %s162 = sphi 0, %s148
      %s166 = sphi 0, %s166
      %s168 = sphi 0, %s166
      %s169 = sphi 0, %s168
      %s183 = sphi 0, %s169
      %s187 = sphi 0, %s187
      %s189 = sphi 0, %s187
      %s190 = sphi 0, %s189
      %s204 = sphi 0, %s190
      %s208 = sphi 0, %s208
      %s210 = sphi 0, %s208
      %s211 = sphi 0, %s210
      %s225 = sphi 0, %s211
      %s229 = sphi 0, %s229
      %s231 = sphi 0, %s229
      %s232 = sphi 0, %s231
      %s246 = sphi 0, %s232
      %s250 = sphi 0, %s250
      %s252 = sphi 0, %s250
      %s253 = sphi 0, %s252
      %s267 = sphi 0, %s253
      %s275 = sphi 0, %s277
      %s278 = sphi 0, %s275
      %s279 = sphi 0, %s278
      %s295 = sphi 0, %s279
    $region4: #{tpu_custom_call.1} parent=1 // loop_header_branch
      %32 = sbr.rel (%p30) target = $region8
    $region5: #{tpu_custom_call.1} parent=1 // loop_body
      %s34 = ssub.s32 %s29, 1
      %s35 = ssub.s32 %s29, 2
      %s42 = sadd.s32 1, %s37
      %p43 = scmp.ge.s32.totalorder %s42, 1
      %s44 = scalar_select %p43, 0, %s42
      %s45 = sadd.s32 1, %s36
      %s46 = scalar_select %p43, %s45, %s36
      %p47 = scmp.ge.s32.totalorder %s46, 2
      %s48 = scalar_select %p47, 0, %s46
      %s49 = ssub.s32 %s36, %s48
      %p50 = scmp.eq.s32.totalorder %s49, 0
      %s52 = sadd.s32 %s51, 1
      %s53 = scalar_select %p50, %s51, %s52
      %p56 = pneg %p50
      %p57 = scmp.eq.s32.totalorder %s29, 1
      %p58 = por %p56, %p57
      %p59 = scmp.ne.s32.totalorder %s51, %s54
      %p60 = scmp.eq.s32.totalorder %s29, 0
      %p61 = por %p59, %p60
      %p62 = scmp.ne.s32.totalorder %s51, %s54
      %p63 = scmp.eq.s32.totalorder %s34, 1
      %p64 = por %p62, %p63
      %p65 = scmp.ne.s32.totalorder %s54, %s55
      %p66 = scmp.eq.s32.totalorder %s34, 0
      %p67 = por %p65, %p66
      %p68 = scmp.ne.s32.totalorder %s54, %s55
      %p69 = scmp.eq.s32.totalorder %s35, 1
      %p70 = por %p68, %p69
      %p72 = scmp.ne.s32.totalorder %s55, %s71
      %p73 = scmp.eq.s32.totalorder %s35, 0
      %p74 = por %p72, %p73
      %s75 = ssub.s32 %s36, %s48
      %s76 = ssub.s32 %s37, %s44
      %s77 = sor.u32 %s75, %s76
      %p78 = scmp.eq.s32.totalorder %s77, 0
      %s80 = sadd.s32 %s79, 1
      %s81 = scalar_select %p78, %s79, %s80
      %p84 = pneg %p78
      %p85 = scmp.eq.s32.totalorder %s29, 1
      %p86 = por %p84, %p85
      %p87 = scmp.ne.s32.totalorder %s79, %s82
      %p88 = scmp.eq.s32.totalorder %s29, 0
      %p89 = por %p87, %p88
      %p90 = scmp.ne.s32.totalorder %s79, %s82
      %p91 = scmp.eq.s32.totalorder %s34, 1
      %p92 = por %p90, %p91
      %p93 = scmp.ne.s32.totalorder %s82, %s83
      %p94 = scmp.eq.s32.totalorder %s34, 0
      %p95 = por %p93, %p94
      %p96 = scmp.ne.s32.totalorder %s82, %s83
      %p97 = scmp.eq.s32.totalorder %s35, 1
      %p98 = por %p96, %p97
      %p100 = scmp.ne.s32.totalorder %s83, %s99
      %p101 = scmp.eq.s32.totalorder %s35, 0
      %p102 = por %p100, %p101
      %s104 = sadd.s32 %s103, 1
      %p107 = scmp.eq.s32.totalorder %s29, 1
      %p108 = scmp.ne.s32.totalorder %s103, %s105
      %p109 = scmp.eq.s32.totalorder %s29, 0
      %p110 = por %p108, %p109
      %p111 = scmp.ne.s32.totalorder %s103, %s105
      %p112 = scmp.eq.s32.totalorder %s34, 1
      %p113 = por %p111, %p112
      %p114 = scmp.ne.s32.totalorder %s105, %s106
      %p115 = scmp.eq.s32.totalorder %s34, 0
      %p116 = por %p114, %p115
      %p117 = scmp.ne.s32.totalorder %s105, %s106
      %p118 = scmp.eq.s32.totalorder %s35, 1
      %p119 = por %p117, %p118
      %p121 = scmp.ne.s32.totalorder %s106, %s120
      %p122 = scmp.eq.s32.totalorder %s35, 0
      %p123 = por %p121, %p122
      %s125 = sadd.s32 %s124, 1
      %p128 = scmp.eq.s32.totalorder %s29, 1
      %p129 = scmp.ne.s32.totalorder %s124, %s126
      %p130 = scmp.eq.s32.totalorder %s29, 0
      %p131 = por %p129, %p130
      %p132 = scmp.ne.s32.totalorder %s124, %s126
      %p133 = scmp.eq.s32.totalorder %s34, 1
      %p134 = por %p132, %p133
      %p135 = scmp.ne.s32.totalorder %s126, %s127
      %p136 = scmp.eq.s32.totalorder %s34, 0
      %p137 = por %p135, %p136
      %p138 = scmp.ne.s32.totalorder %s126, %s127
      %p139 = scmp.eq.s32.totalorder %s35, 1
      %p140 = por %p138, %p139
      %p142 = scmp.ne.s32.totalorder %s127, %s141
      %p143 = scmp.eq.s32.totalorder %s35, 0
      %p144 = por %p142, %p143
      %s146 = sadd.s32 %s145, 1
      %p149 = scmp.eq.s32.totalorder %s29, 1
      %p150 = scmp.ne.s32.totalorder %s145, %s147
      %p151 = scmp.eq.s32.totalorder %s29, 0
      %p152 = por %p150, %p151
      %p153 = scmp.ne.s32.totalorder %s145, %s147
      %p154 = scmp.eq.s32.totalorder %s34, 1
      %p155 = por %p153, %p154
      %p156 = scmp.ne.s32.totalorder %s147, %s148
      %p157 = scmp.eq.s32.totalorder %s34, 0
      %p158 = por %p156, %p157
      %p159 = scmp.ne.s32.totalorder %s147, %s148
      %p160 = scmp.eq.s32.totalorder %s35, 1
      %p161 = por %p159, %p160
      %p163 = scmp.ne.s32.totalorder %s148, %s162
      %p164 = scmp.eq.s32.totalorder %s35, 0
      %p165 = por %p163, %p164
      %s167 = sadd.s32 %s166, 1
      %p170 = scmp.eq.s32.totalorder %s29, 1
      %p171 = scmp.ne.s32.totalorder %s166, %s168
      %p172 = scmp.eq.s32.totalorder %s29, 0
      %p173 = por %p171, %p172
      %p174 = scmp.ne.s32.totalorder %s166, %s168
      %p175 = scmp.eq.s32.totalorder %s34, 1
      %p176 = por %p174, %p175
      %p177 = scmp.ne.s32.totalorder %s168, %s169
      %p178 = scmp.eq.s32.totalorder %s34, 0
      %p179 = por %p177, %p178
      %p180 = scmp.ne.s32.totalorder %s168, %s169
      %p181 = scmp.eq.s32.totalorder %s35, 1
      %p182 = por %p180, %p181
      %p184 = scmp.ne.s32.totalorder %s169, %s183
      %p185 = scmp.eq.s32.totalorder %s35, 0
      %p186 = por %p184, %p185
      %s188 = sadd.s32 %s187, 1
      %p191 = scmp.eq.s32.totalorder %s29, 1
      %p192 = scmp.ne.s32.totalorder %s187, %s189
      %p193 = scmp.eq.s32.totalorder %s29, 0
      %p194 = por %p192, %p193
      %p195 = scmp.ne.s32.totalorder %s187, %s189
      %p196 = scmp.eq.s32.totalorder %s34, 1
      %p197 = por %p195, %p196
      %p198 = scmp.ne.s32.totalorder %s189, %s190
      %p199 = scmp.eq.s32.totalorder %s34, 0
      %p200 = por %p198, %p199
      %p201 = scmp.ne.s32.totalorder %s189, %s190
      %p202 = scmp.eq.s32.totalorder %s35, 1
      %p203 = por %p201, %p202
      %p205 = scmp.ne.s32.totalorder %s190, %s204
      %p206 = scmp.eq.s32.totalorder %s35, 0
      %p207 = por %p205, %p206
      %s209 = sadd.s32 %s208, 1
      %p212 = scmp.eq.s32.totalorder %s29, 1
      %p213 = scmp.ne.s32.totalorder %s208, %s210
      %p214 = scmp.eq.s32.totalorder %s29, 0
      %p215 = por %p213, %p214
      %p216 = scmp.ne.s32.totalorder %s208, %s210
      %p217 = scmp.eq.s32.totalorder %s34, 1
      %p218 = por %p216, %p217
      %p219 = scmp.ne.s32.totalorder %s210, %s211
      %p220 = scmp.eq.s32.totalorder %s34, 0
      %p221 = por %p219, %p220
      %p222 = scmp.ne.s32.totalorder %s210, %s211
      %p223 = scmp.eq.s32.totalorder %s35, 1
      %p224 = por %p222, %p223
      %p226 = scmp.ne.s32.totalorder %s211, %s225
      %p227 = scmp.eq.s32.totalorder %s35, 0
      %p228 = por %p226, %p227
      %s230 = sadd.s32 %s229, 1
      %p233 = scmp.eq.s32.totalorder %s29, 1
      %p234 = scmp.ne.s32.totalorder %s229, %s231
      %p235 = scmp.eq.s32.totalorder %s29, 0
      %p236 = por %p234, %p235
      %p237 = scmp.ne.s32.totalorder %s229, %s231
      %p238 = scmp.eq.s32.totalorder %s34, 1
      %p239 = por %p237, %p238
      %p240 = scmp.ne.s32.totalorder %s231, %s232
      %p241 = scmp.eq.s32.totalorder %s34, 0
      %p242 = por %p240, %p241
      %p243 = scmp.ne.s32.totalorder %s231, %s232
      %p244 = scmp.eq.s32.totalorder %s35, 1
      %p245 = por %p243, %p244
      %p247 = scmp.ne.s32.totalorder %s232, %s246
      %p248 = scmp.eq.s32.totalorder %s35, 0
      %p249 = por %p247, %p248
      %s251 = sadd.s32 %s250, 1
      %p254 = scmp.eq.s32.totalorder %s29, 1
      %p255 = scmp.ne.s32.totalorder %s250, %s252
      %p256 = scmp.eq.s32.totalorder %s29, 0
      %p257 = por %p255, %p256
      %p258 = scmp.ne.s32.totalorder %s250, %s252
      %p259 = scmp.eq.s32.totalorder %s34, 1
      %p260 = por %p258, %p259
      %p261 = scmp.ne.s32.totalorder %s252, %s253
      %p262 = scmp.eq.s32.totalorder %s34, 0
      %p263 = por %p261, %p262
      %p264 = scmp.ne.s32.totalorder %s252, %s253
      %p265 = scmp.eq.s32.totalorder %s35, 1
      %p266 = por %p264, %p265
      %p268 = scmp.ne.s32.totalorder %s253, %s267
      %p269 = scmp.eq.s32.totalorder %s35, 0
      %p270 = por %p268, %p269
      %s271 = ssub.s32 %s36, %s48
      %s272 = ssub.s32 %s37, %s44
      %s273 = sor.u32 %s271, %s272
      %p274 = scmp.eq.s32.totalorder %s273, 0
      %s276 = sadd.s32 %s275, 1
      %s277 = scalar_select %p274, %s275, %s276
      %p280 = pneg %p274
      %p281 = scmp.eq.s32.totalorder %s29, 1
      %p282 = por %p280, %p281
      %p283 = scmp.ne.s32.totalorder %s275, %s278
      %p284 = scmp.eq.s32.totalorder %s29, 0
      %p285 = por %p283, %p284
      %p286 = scmp.ne.s32.totalorder %s275, %s278
      %p287 = scmp.eq.s32.totalorder %s34, 1
      %p288 = por %p286, %p287
      %p289 = scmp.ne.s32.totalorder %s278, %s279
      %p290 = scmp.eq.s32.totalorder %s34, 0
      %p291 = por %p289, %p290
      %p292 = scmp.ne.s32.totalorder %s278, %s279
      %p293 = scmp.eq.s32.totalorder %s35, 1
      %p294 = por %p292, %p293
      %p296 = scmp.ne.s32.totalorder %s279, %s295
      %p297 = scmp.eq.s32.totalorder %s35, 0
      %p298 = por %p296, %p297
      %p299 = scmp.le.s32.totalorder 1, %s29
      %p300 = scmp.lt.s32.totalorder %s29, 3
      %p301 = pnand %p299, %p300
      %p302 = pneg %p301
      // Predicated region
      $region9: #{tpu_custom_call.1} parent=5 // pred_check
        _
      $region10: #{tpu_custom_call.1} parent=5 // pred_check_branch
        %304 = sbr.rel (%p301) target = $region12
      $region11: #{tpu_custom_call.1} parent=5 // pred_region
        %s305 = ssub.s32 %s29, 1
        // Predicated region
        $region13: #{tpu_custom_call.1} parent=11 // pred_check
          %p306 = pneg %p116
        $region14: #{tpu_custom_call.1} parent=11 // pred_check_branch
          %308 = sbr.rel (%p306) target = $region16
        $region15: #{tpu_custom_call.1} parent=11 // pred_region
          %s310 = ssub.s32 1024, 1024
          %311 = vsyncadd [#allocation7], %s310
          %s312 = sshll.u32 [#allocation8], 4
          %s313 = int_to_ptr.vmem [resolvable:$true] %s312
          %318 = dma.hbm_to_vmem [thread:$0]  %s2, 1024, %s313, [#allocation7], 256, 256, 16
        $region16: #{tpu_custom_call.1} parent=11 // pred_fallthru
          _
        // Predicated region
        $region17: #{tpu_custom_call.1} parent=11 // pred_check
          %p319 = pneg %p137
        $region18: #{tpu_custom_call.1} parent=11 // pred_check_branch
          %321 = sbr.rel (%p319) target = $region20
        $region19: #{tpu_custom_call.1} parent=11 // pred_region
          _
        $region20: #{tpu_custom_call.1} parent=11 // pred_fallthru
          _
        // Predicated region
        $region21: #{tpu_custom_call.1} parent=11 // pred_check
          %p322 = pneg %p158
        $region22: #{tpu_custom_call.1} parent=11 // pred_check_branch
          %324 = sbr.rel (%p322) target = $region24
        $region23: #{tpu_custom_call.1} parent=11 // pred_region
          %s326 = ssub.s32 1024, 1024
          %327 = vsyncadd [#allocation10], %s326
          %s328 = sshll.u32 [#allocation9], 4
          %s329 = int_to_ptr.vmem [resolvable:$true] %s328
          %334 = dma.hbm_to_vmem [thread:$0]  %s4, 1024, %s329, [#allocation10], 256, 256, 16
        $region24: #{tpu_custom_call.1} parent=11 // pred_fallthru
          _
        // Predicated region
        $region25: #{tpu_custom_call.1} parent=11 // pred_check
          %p335 = pneg %p179
        $region26: #{tpu_custom_call.1} parent=11 // pred_check_branch
          %337 = sbr.rel (%p335) target = $region28
        $region27: #{tpu_custom_call.1} parent=11 // pred_region
          _
        $region28: #{tpu_custom_call.1} parent=11 // pred_fallthru
          _
        // Predicated region
        $region29: #{tpu_custom_call.1} parent=11 // pred_check
          %p338 = pneg %p200
        $region30: #{tpu_custom_call.1} parent=11 // pred_check_branch
          %340 = sbr.rel (%p338) target = $region32
        $region31: #{tpu_custom_call.1} parent=11 // pred_region
          %s342 = ssub.s32 4096, 4096
          %343 = vsyncadd [#allocation10], %s342
          %s344 = sshll.u32 [#allocation11], 4
          %s345 = int_to_ptr.vmem [resolvable:$true] %s344
          %350 = dma.hbm_to_vmem [thread:$0]  %s6, 4096, %s345, [#allocation10], 64, 64, 4
        $region32: #{tpu_custom_call.1} parent=11 // pred_fallthru
          _
        // Predicated region
        $region33: #{tpu_custom_call.1} parent=11 // pred_check
          %p351 = pneg %p221
        $region34: #{tpu_custom_call.1} parent=11 // pred_check_branch
          %353 = sbr.rel (%p351) target = $region36
        $region35: #{tpu_custom_call.1} parent=11 // pred_region
          _
        $region36: #{tpu_custom_call.1} parent=11 // pred_fallthru
          _
        // Predicated region
        $region37: #{tpu_custom_call.1} parent=11 // pred_check
          %p354 = pneg %p242
        $region38: #{tpu_custom_call.1} parent=11 // pred_check_branch
          %356 = sbr.rel (%p354) target = $region40
        $region39: #{tpu_custom_call.1} parent=11 // pred_region
          %s358 = ssub.s32 4096, 4096
          %359 = vsyncadd [#allocation13], %s358
          %s360 = sshll.u32 [#allocation12], 4
          %s361 = int_to_ptr.vmem [resolvable:$true] %s360
          %366 = dma.hbm_to_vmem [thread:$0]  %s8, 4096, %s361, [#allocation13], 64, 64, 4
        $region40: #{tpu_custom_call.1} parent=11 // pred_fallthru
          _
        // Predicated region
        $region41: #{tpu_custom_call.1} parent=11 // pred_check
          %p367 = pneg %p263
        $region42: #{tpu_custom_call.1} parent=11 // pred_check_branch
          %369 = sbr.rel (%p367) target = $region44
        $region43: #{tpu_custom_call.1} parent=11 // pred_region
          _
        $region44: #{tpu_custom_call.1} parent=11 // pred_fallthru
          _
      $region12: #{tpu_custom_call.1} parent=5 // pred_fallthru
        _
      %p370 = scmp.lt.s32.totalorder %s29, 2
      // Predicated region
      $region45: #{tpu_custom_call.1} parent=5 // pred_check
        %p371 = pneg %p370
      $region46: #{tpu_custom_call.1} parent=5 // pred_check_branch
        %373 = sbr.rel (%p371) target = $region48
      $region47: #{tpu_custom_call.1} parent=5 // pred_region
        // Predicated region
        $region49: #{tpu_custom_call.1} parent=47 // pred_check
          %p374 = pneg %p61
        $region50: #{tpu_custom_call.1} parent=47 // pred_check_branch
          %376 = sbr.rel (%p374) target = $region52
        $region51: #{tpu_custom_call.1} parent=47 // pred_region
          %s377 = sand.u32 %s51, 1
          %s378 = scalar_lea.sflag [#allocation4], %s377
          %s379 = sand.u32 %s51, 1
          %s380 = scalar_lea.vmem [#allocation3], %s379
          %s382 = ssub.s32 16, 16
          %383 = vsyncadd %s378, %s382
          %s384 = smul.addr %s36, 16
          %s385 = scalar_lea.hbm %s0, %s384
          %s387 = sshll.u32 %s380, 4
          %s388 = int_to_ptr.vmem [resolvable:$true] %s387
          %390 = dma.hbm_to_vmem [thread:$0]  %s385, 16, %s388, %s378
        $region52: #{tpu_custom_call.1} parent=47 // pred_fallthru
          _
        // Predicated region
        $region53: #{tpu_custom_call.1} parent=47 // pred_check
          %p391 = pneg %p89
        $region54: #{tpu_custom_call.1} parent=47 // pred_check_branch
          %393 = sbr.rel (%p391) target = $region56
        $region55: #{tpu_custom_call.1} parent=47 // pred_region
          %s394 = sand.u32 %s29, 1
          %s395 = scalar_lea.sflag [#allocation7], %s394
          %s396 = sand.u32 %s79, 1
          %s397 = smul.addr %s396, 8
          %s398 = scalar_lea.vmem [#allocation6], %s397
          %s400 = ssub.s32 128, 128
          %401 = vsyncadd %s395, %s400
          %s402 = sadd.s32 %s37, %s36
          %s403 = smul.addr %s402, 128
          %s404 = scalar_lea.hbm %s1, %s403
          %s406 = sshll.u32 %s398, 4
          %s407 = int_to_ptr.vmem [resolvable:$true] %s406
          %409 = dma.hbm_to_vmem [thread:$0]  %s404, 128, %s407, %s395
        $region56: #{tpu_custom_call.1} parent=47 // pred_fallthru
          _
      $region48: #{tpu_custom_call.1} parent=5 // pred_fallthru
        _
      %p410 = scmp.le.s32.totalorder 1, %s29
      %p411 = scmp.lt.s32.totalorder %s29, 3
      %p412 = pnand %p410, %p411
      %p413 = pneg %p412
      // Predicated region
      $region57: #{tpu_custom_call.1} parent=5 // pred_check
        _
      $region58: #{tpu_custom_call.1} parent=5 // pred_check_branch
        %415 = sbr.rel (%p412) target = $region60
      $region59: #{tpu_custom_call.1} parent=5 // pred_region
        %s416 = ssub.s32 %s29, 1
        %s417 = sand.u32 %s54, 1
        %s418 = scalar_lea.sflag [#allocation4], %s417
        %s419 = sand.u32 %s54, 1
        %s420 = scalar_lea.vmem [#allocation3], %s419
        // Predicated region
        $region61: #{tpu_custom_call.1} parent=59 // pred_check
          %p421 = pneg %p67
        $region62: #{tpu_custom_call.1} parent=59 // pred_check_branch
          %423 = sbr.rel (%p421) target = $region64
        $region63: #{tpu_custom_call.1} parent=59 // pred_region
          %424 = dma.done %s418, 16
        $region64: #{tpu_custom_call.1} parent=59 // pred_fallthru
          _
        %s425 = sand.u32 %s34, 1
        %s426 = scalar_lea.sflag [#allocation7], %s425
        %s427 = sand.u32 %s82, 1
        %s428 = smul.addr %s427, 8
        %s429 = scalar_lea.vmem [#allocation6], %s428
        // Predicated region
        $region65: #{tpu_custom_call.1} parent=59 // pred_check
          %p430 = pneg %p95
        $region66: #{tpu_custom_call.1} parent=59 // pred_check_branch
          %432 = sbr.rel (%p430) target = $region68
        $region67: #{tpu_custom_call.1} parent=59 // pred_region
          %433 = dma.done %s426, 128
        $region68: #{tpu_custom_call.1} parent=59 // pred_fallthru
          _
        // Predicated region
        $region69: #{tpu_custom_call.1} parent=59 // pred_check
          %p434 = pneg %p116
        $region70: #{tpu_custom_call.1} parent=59 // pred_check_branch
          %436 = sbr.rel (%p434) target = $region72
        $region71: #{tpu_custom_call.1} parent=59 // pred_region
          %437 = dma.done [#allocation7], 1024
        $region72: #{tpu_custom_call.1} parent=59 // pred_fallthru
          _
        // Predicated region
        $region73: #{tpu_custom_call.1} parent=59 // pred_check
          %p438 = pneg %p158
        $region74: #{tpu_custom_call.1} parent=59 // pred_check_branch
          %440 = sbr.rel (%p438) target = $region76
        $region75: #{tpu_custom_call.1} parent=59 // pred_region
          %441 = dma.done [#allocation10], 1024
        $region76: #{tpu_custom_call.1} parent=59 // pred_fallthru
          _
        // Predicated region
        $region77: #{tpu_custom_call.1} parent=59 // pred_check
          %p442 = pneg %p200
        $region78: #{tpu_custom_call.1} parent=59 // pred_check_branch
          %444 = sbr.rel (%p442) target = $region80
        $region79: #{tpu_custom_call.1} parent=59 // pred_region
          %445 = dma.done [#allocation10], 4096
        $region80: #{tpu_custom_call.1} parent=59 // pred_fallthru
          _
        // Predicated region
        $region81: #{tpu_custom_call.1} parent=59 // pred_check
          %p446 = pneg %p242
        $region82: #{tpu_custom_call.1} parent=59 // pred_check_branch
          %448 = sbr.rel (%p446) target = $region84
        $region83: #{tpu_custom_call.1} parent=59 // pred_region
          %449 = dma.done [#allocation13], 4096
        $region84: #{tpu_custom_call.1} parent=59 // pred_fallthru
          _
        %s450 = sand.u32 %s54, 1
        %s451 = scalar_lea.sflag [#allocation4], %s450
        %s452 = sand.u32 %s54, 1
        %s453 = scalar_lea.vmem [#allocation3], %s452
        %p454 = pneg %p67
        %p455 = pneg %p64
        %s456 = sand.u32 %s34, 1
        %s457 = scalar_lea.sflag [#allocation7], %s456
        %s458 = sand.u32 %s82, 1
        %s459 = smul.addr %s458, 8
        %s460 = scalar_lea.vmem [#allocation6], %s459
        %p461 = pneg %p95
        %p462 = pneg %p92
        %p463 = pneg %p116
        %p464 = pneg %p113
        %p465 = pneg %p137
        %p466 = pneg %p134
        %p467 = pneg %p158
        %p468 = pneg %p155
        %p469 = pneg %p179
        %p470 = pneg %p176
        %p471 = pneg %p200
        %p472 = pneg %p197
        %p473 = pneg %p221
        %p474 = pneg %p218
        %p475 = pneg %p242
        %p476 = pneg %p239
        %p477 = pneg %p263
        %p478 = pneg %p260
        %p479 = pneg %p291
        %p480 = pneg %p288
        %s481 = sand.u32 %s278, 1
        %s482 = scalar_lea.sflag [#allocation5], %s481
        %s483 = sand.u32 %s278, 1
        %s484 = smul.addr %s483, 8
        %s485 = scalar_lea.vmem [#allocation14], %s484
        %v487 = vld [vmem:[%s420] sm:$0x1]
        %v488 = vld [vmem:[%s429] sm:$0xff]
        %v490 = vlaneseq
        %v491 = vshrl.u32 %v490, 7
        %v492 = vsub.s32 0, %v491
        %v493 = vrot.slane %v487, %v492
        %v495 = vmul.f32 %v493, %v488
        %v496 = vpack.c.bf16 %v495, %v495
        %v497 = vld [vmem:[#allocation8] sm:$0xff]
        %v498 = vld [vmem:[#allocation8 + $0x8] sm:$0xff]
        %v499 = vld [vmem:[#allocation8 + $0x10] sm:$0xff]
        %v500 = vld [vmem:[#allocation8 + $0x18] sm:$0xff]
        %v501 = vld [vmem:[#allocation8 + $0x20] sm:$0xff]
        %v502 = vld [vmem:[#allocation8 + $0x28] sm:$0xff]
        %v503 = vld [vmem:[#allocation8 + $0x30] sm:$0xff]
        %v504 = vld [vmem:[#allocation8 + $0x38] sm:$0xff]
        %v505 = vld [vmem:[%s3] sm:$0xf]
        %v507 = vlaneseq
        %v508 = vshrl.u32 %v507, 7
        %v509 = vsub.s32 0, %v508
        %v510 = vrot.slane %v505, %v509
        %v511 = vlaneseq
        %v512 = vshrl.u32 %v511, 7
        %v513 = vsub.s32 1, %v512
        %v514 = vrot.slane %v505, %v513
        %v515 = vlaneseq
        %v516 = vshrl.u32 %v515, 7
        %v517 = vsub.s32 2, %v516
        %v518 = vrot.slane %v505, %v517
        %v519 = vlaneseq
        %v520 = vshrl.u32 %v519, 7
        %v521 = vsub.s32 3, %v520
        %v522 = vrot.slane %v505, %v521
        %v535 = vunpack.c.l.b16 %v497
        %v536 = vunpack.c.h.b16 %v497
        %v537 = vunpack.c.l.b16 %v498
        %v538 = vunpack.c.h.b16 %v498
        %v539 = vunpack.c.l.b16 %v499
        %v540 = vunpack.c.h.b16 %v499
        %v541 = vunpack.c.l.b16 %v500
        %v542 = vunpack.c.h.b16 %v500
        %v543 = vunpack.c.l.b16 %v501
        %v544 = vunpack.c.h.b16 %v501
        %v545 = vunpack.c.l.b16 %v502
        %v546 = vunpack.c.h.b16 %v502
        %v547 = vunpack.c.l.b16 %v503
        %v548 = vunpack.c.h.b16 %v503
        %v549 = vunpack.c.l.b16 %v504
        %v550 = vunpack.c.h.b16 %v504
        %v551 = vpack.c.b16 %v539, %v535
        %v552 = vpack.c.b16 %v540, %v536
        %v553 = vpack.c.b16 %v541, %v537
        %v554 = vpack.c.b16 %v542, %v538
        %v555 = vpack.c.b16 %v547, %v543
        %v556 = vpack.c.b16 %v548, %v544
        %v557 = vpack.c.b16 %v549, %v545
        %v558 = vpack.c.b16 %v550, %v546
        %vm567 = vcmask 261120
        %v569 = vsel %vm567, %v496, 0
        %571 = vmatprep.subr.bf16.mxu0 0
        %572 = vmatpush1.bf16.msra.mxu0 0
        %573 = vmatprep.subr.bf16.mxu0 0
        %574 = vmatpush1.bf16.msra.mxu0 0
        %575 = vmatprep.subr.bf16.mxu0 0
        %576 = vmatpush1.bf16.msra.mxu0 0
        %577 = vmatprep.subr.bf16.mxu0 0
        %578 = vmatpush1.bf16.msra.mxu0 0
        %579 = vmatprep.subr.bf16.mxu0 0
        %580 = vmatpush1.bf16.msra.mxu0 0
        %581 = vmatprep.subr.bf16.mxu0 0
        %582 = vmatpush1.bf16.msra.mxu0 0
        %583 = vmatprep.subr.bf16.mxu0 %v556
        %584 = vmatpush1.bf16.msra.mxu0 %v555
        %585 = vmatprep.subr.bf16.mxu0 %v552
        %586 = vmatpush1.bf16.msra.mxu0 %v551
        %587 = vmatprep.subr.bf16.mxu0 0
        %588 = vmatpush2.bf16.msra.mxu0 0
        %589 = vmatprep.subr.bf16.mxu0 0
        %590 = vmatpush2.bf16.msra.mxu0 0
        %591 = vmatprep.subr.bf16.mxu0 0
        %592 = vmatpush2.bf16.msra.mxu0 0
        %593 = vmatprep.subr.bf16.mxu0 0
        %594 = vmatpush2.bf16.msra.mxu0 0
        %595 = vmatprep.subr.bf16.mxu0 0
        %596 = vmatpush2.bf16.msra.mxu0 0
        %597 = vmatprep.subr.bf16.mxu0 0
        %598 = vmatpush2.bf16.msra.mxu0 0
        %599 = vmatprep.subr.bf16.mxu0 0
        %600 = vmatpush2.bf16.msra.mxu0 0
        %601 = vmatprep.subr.bf16.mxu0 0
        %602 = vmatpush2.bf16.msra.mxu0 0
        %603 = vmatprep.mubr.bf16.mxu0 0
        %604 = vmatmul.mubr.bf16.gmra.mxu0 %v569
        %v605 = vpop.f32.mrf.mxu0
        %v606 = vadd.f32 %v510, %v605
        %v607 = vpop.f32.mrf.mxu0
        %v608 = vadd.f32 %v514, %v607
        %v609 = vpop.f32.mrf.mxu0
        %v610 = vpop.f32.mrf.mxu0
        %611 = vdwg.mxu0
        %612 = vmatprep.subr.bf16.mxu0 0
        %613 = vmatpush1.bf16.msra.mxu0 0
        %614 = vmatprep.subr.bf16.mxu0 0
        %615 = vmatpush1.bf16.msra.mxu0 0
        %616 = vmatprep.subr.bf16.mxu0 0
        %617 = vmatpush1.bf16.msra.mxu0 0
        %618 = vmatprep.subr.bf16.mxu0 0
        %619 = vmatpush1.bf16.msra.mxu0 0
        %620 = vmatprep.subr.bf16.mxu0 0
        %621 = vmatpush1.bf16.msra.mxu0 0
        %622 = vmatprep.subr.bf16.mxu0 0
        %623 = vmatpush1.bf16.msra.mxu0 0
        %624 = vmatprep.subr.bf16.mxu0 %v558
        %625 = vmatpush1.bf16.msra.mxu0 %v557
        %626 = vmatprep.subr.bf16.mxu0 %v554
        %627 = vmatpush1.bf16.msra.mxu0 %v553
        %628 = vmatprep.subr.bf16.mxu0 0
        %629 = vmatpush2.bf16.msra.mxu0 0
        %630 = vmatprep.subr.bf16.mxu0 0
        %631 = vmatpush2.bf16.msra.mxu0 0
        %632 = vmatprep.subr.bf16.mxu0 0
        %633 = vmatpush2.bf16.msra.mxu0 0
        %634 = vmatprep.subr.bf16.mxu0 0
        %635 = vmatpush2.bf16.msra.mxu0 0
        %636 = vmatprep.subr.bf16.mxu0 0
        %637 = vmatpush2.bf16.msra.mxu0 0
        %638 = vmatprep.subr.bf16.mxu0 0
        %639 = vmatpush2.bf16.msra.mxu0 0
        %640 = vmatprep.subr.bf16.mxu0 0
        %641 = vmatpush2.bf16.msra.mxu0 0
        %642 = vmatprep.subr.bf16.mxu0 0
        %643 = vmatpush2.bf16.msra.mxu0 0
        %644 = vmatprep.mubr.bf16.mxu0 0
        %645 = vmatmul.mubr.bf16.gmra.mxu0 %v569
        %v646 = vpop.f32.mrf.mxu0
        %v647 = vadd.f32 %v518, %v646
        %v648 = vpop.f32.mrf.mxu0
        %v649 = vadd.f32 %v522, %v648
        %v650 = vpop.f32.mrf.mxu0
        %v651 = vpop.f32.mrf.mxu0
        %652 = vdwg.mxu0
        %v653 = vmax.f32 %v606, 0.0
        %v654 = vmax.f32 %v608, 0.0
        %v655 = vmax.f32 %v647, 0.0
        %v656 = vmax.f32 %v649, 0.0
        %v657 = vpack.c.bf16 %v653, %v653
        %v658 = vpack.c.bf16 %v654, %v654
        %v659 = vpack.c.bf16 %v655, %v655
        %v660 = vpack.c.bf16 %v656, %v656
        %v661 = vld [vmem:[#allocation11] sm:$0xf]
        %v662 = vld [vmem:[#allocation11 + $0x4] sm:$0xf]
        %v663 = vld [vmem:[#allocation11 + $0x8] sm:$0xf]
        %v664 = vld [vmem:[#allocation11 + $0xc] sm:$0xf]
        %v665 = vld [vmem:[#allocation11 + $0x10] sm:$0xf]
        %v666 = vld [vmem:[#allocation11 + $0x14] sm:$0xf]
        %v667 = vld [vmem:[#allocation11 + $0x18] sm:$0xf]
        %v668 = vld [vmem:[#allocation11 + $0x1c] sm:$0xf]
        %v669 = vld [vmem:[#allocation11 + $0x20] sm:$0xf]
        %v670 = vld [vmem:[#allocation11 + $0x24] sm:$0xf]
        %v671 = vld [vmem:[#allocation11 + $0x28] sm:$0xf]
        %v672 = vld [vmem:[#allocation11 + $0x2c] sm:$0xf]
        %v673 = vld [vmem:[#allocation11 + $0x30] sm:$0xf]
        %v674 = vld [vmem:[#allocation11 + $0x34] sm:$0xf]
        %v675 = vld [vmem:[#allocation11 + $0x38] sm:$0xf]
        %v676 = vld [vmem:[#allocation11 + $0x3c] sm:$0xf]
        %v677 = vld [vmem:[#allocation11 + $0x40] sm:$0xf]
        %v678 = vld [vmem:[#allocation11 + $0x44] sm:$0xf]
        %v679 = vld [vmem:[#allocation11 + $0x48] sm:$0xf]
        %v680 = vld [vmem:[#allocation11 + $0x4c] sm:$0xf]
        %v681 = vld [vmem:[#allocation11 + $0x50] sm:$0xf]
        %v682 = vld [vmem:[#allocation11 + $0x54] sm:$0xf]
        %v683 = vld [vmem:[#allocation11 + $0x58] sm:$0xf]
        %v684 = vld [vmem:[#allocation11 + $0x5c] sm:$0xf]
        %v685 = vld [vmem:[#allocation11 + $0x60] sm:$0xf]
        %v686 = vld [vmem:[#allocation11 + $0x64] sm:$0xf]
        %v687 = vld [vmem:[#allocation11 + $0x68] sm:$0xf]
        %v688 = vld [vmem:[#allocation11 + $0x6c] sm:$0xf]
        %v689 = vld [vmem:[#allocation11 + $0x70] sm:$0xf]
        %v690 = vld [vmem:[#allocation11 + $0x74] sm:$0xf]
        %v691 = vld [vmem:[#allocation11 + $0x78] sm:$0xf]
        %v692 = vld [vmem:[#allocation11 + $0x7c] sm:$0xf]
        %v693 = vld [vmem:[#allocation11 + $0x80] sm:$0xf]
        %v694 = vld [vmem:[#allocation11 + $0x84] sm:$0xf]
        %v695 = vld [vmem:[#allocation11 + $0x88] sm:$0xf]
        %v696 = vld [vmem:[#allocation11 + $0x8c] sm:$0xf]
        %v697 = vld [vmem:[#allocation11 + $0x90] sm:$0xf]
        %v698 = vld [vmem:[#allocation11 + $0x94] sm:$0xf]
        %v699 = vld [vmem:[#allocation11 + $0x98] sm:$0xf]
        %v700 = vld [vmem:[#allocation11 + $0x9c] sm:$0xf]
        %v701 = vld [vmem:[#allocation11 + $0xa0] sm:$0xf]
        %v702 = vld [vmem:[#allocation11 + $0xa4] sm:$0xf]
        %v703 = vld [vmem:[#allocation11 + $0xa8] sm:$0xf]
        %v704 = vld [vmem:[#allocation11 + $0xac] sm:$0xf]
        %v705 = vld [vmem:[#allocation11 + $0xb0] sm:$0xf]
        %v706 = vld [vmem:[#allocation11 + $0xb4] sm:$0xf]
        %v707 = vld [vmem:[#allocation11 + $0xb8] sm:$0xf]
        %v708 = vld [vmem:[#allocation11 + $0xbc] sm:$0xf]
        %v709 = vld [vmem:[#allocation11 + $0xc0] sm:$0xf]
        %v710 = vld [vmem:[#allocation11 + $0xc4] sm:$0xf]
        %v711 = vld [vmem:[#allocation11 + $0xc8] sm:$0xf]
        %v712 = vld [vmem:[#allocation11 + $0xcc] sm:$0xf]
        %v713 = vld [vmem:[#allocation11 + $0xd0] sm:$0xf]
        %v714 = vld [vmem:[#allocation11 + $0xd4] sm:$0xf]
        %v715 = vld [vmem:[#allocation11 + $0xd8] sm:$0xf]
        %v716 = vld [vmem:[#allocation11 + $0xdc] sm:$0xf]
        %v717 = vld [vmem:[#allocation11 + $0xe0] sm:$0xf]
        %v718 = vld [vmem:[#allocation11 + $0xe4] sm:$0xf]
        %v719 = vld [vmem:[#allocation11 + $0xe8] sm:$0xf]
        %v720 = vld [vmem:[#allocation11 + $0xec] sm:$0xf]
        %v721 = vld [vmem:[#allocation11 + $0xf0] sm:$0xf]
        %v722 = vld [vmem:[#allocation11 + $0xf4] sm:$0xf]
        %v723 = vld [vmem:[#allocation11 + $0xf8] sm:$0xf]
        %v724 = vld [vmem:[#allocation11 + $0xfc] sm:$0xf]
        %v725 = vld [vmem:[%s7] sm:$0x1]
        %v727 = vlaneseq
        %v728 = vshrl.u32 %v727, 7
        %v729 = vsub.s32 0, %v728
        %v730 = vrot.slane %v725, %v729
        %v796 = vunpack.c.l.b16 %v661
        %v797 = vunpack.c.l.b16 %v662
        %v798 = vunpack.c.l.b16 %v663
        %v799 = vunpack.c.l.b16 %v664
        %v800 = vunpack.c.l.b16 %v665
        %v801 = vunpack.c.l.b16 %v666
        %v802 = vunpack.c.l.b16 %v667
        %v803 = vunpack.c.l.b16 %v668
        %v804 = vunpack.c.l.b16 %v669
        %v805 = vunpack.c.l.b16 %v670
        %v806 = vunpack.c.l.b16 %v671
        %v807 = vunpack.c.l.b16 %v672
        %v808 = vunpack.c.l.b16 %v673
        %v809 = vunpack.c.l.b16 %v674
        %v810 = vunpack.c.l.b16 %v675
        %v811 = vunpack.c.l.b16 %v676
        %v812 = vunpack.c.l.b16 %v677
        %v813 = vunpack.c.l.b16 %v678
        %v814 = vunpack.c.l.b16 %v679
        %v815 = vunpack.c.l.b16 %v680
        %v816 = vunpack.c.l.b16 %v681
        %v817 = vunpack.c.l.b16 %v682
        %v818 = vunpack.c.l.b16 %v683
        %v819 = vunpack.c.l.b16 %v684
        %v820 = vunpack.c.l.b16 %v685
        %v821 = vunpack.c.l.b16 %v686
        %v822 = vunpack.c.l.b16 %v687
        %v823 = vunpack.c.l.b16 %v688
        %v824 = vunpack.c.l.b16 %v689
        %v825 = vunpack.c.l.b16 %v690
        %v826 = vunpack.c.l.b16 %v691
        %v827 = vunpack.c.l.b16 %v692
        %v828 = vunpack.c.l.b16 %v693
        %v829 = vunpack.c.l.b16 %v694
        %v830 = vunpack.c.l.b16 %v695
        %v831 = vunpack.c.l.b16 %v696
        %v832 = vunpack.c.l.b16 %v697
        %v833 = vunpack.c.l.b16 %v698
        %v834 = vunpack.c.l.b16 %v699
        %v835 = vunpack.c.l.b16 %v700
        %v836 = vunpack.c.l.b16 %v701
        %v837 = vunpack.c.l.b16 %v702
        %v838 = vunpack.c.l.b16 %v703
        %v839 = vunpack.c.l.b16 %v704
        %v840 = vunpack.c.l.b16 %v705
        %v841 = vunpack.c.l.b16 %v706
        %v842 = vunpack.c.l.b16 %v707
        %v843 = vunpack.c.l.b16 %v708
        %v844 = vunpack.c.l.b16 %v709
        %v845 = vunpack.c.l.b16 %v710
        %v846 = vunpack.c.l.b16 %v711
        %v847 = vunpack.c.l.b16 %v712
        %v848 = vunpack.c.l.b16 %v713
        %v849 = vunpack.c.l.b16 %v714
        %v850 = vunpack.c.l.b16 %v715
        %v851 = vunpack.c.l.b16 %v716
        %v852 = vunpack.c.l.b16 %v717
        %v853 = vunpack.c.l.b16 %v718
        %v854 = vunpack.c.l.b16 %v719
        %v855 = vunpack.c.l.b16 %v720
        %v856 = vunpack.c.l.b16 %v721
        %v857 = vunpack.c.l.b16 %v722
        %v858 = vunpack.c.l.b16 %v723
        %v859 = vunpack.c.l.b16 %v724
        %v860 = vpack.c.b16 %v797, %v796
        %v861 = vpack.c.b16 %v799, %v798
        %v862 = vpack.c.b16 %v801, %v800
        %v863 = vpack.c.b16 %v803, %v802
        %v864 = vpack.c.b16 %v805, %v804
        %v865 = vpack.c.b16 %v807, %v806
        %v866 = vpack.c.b16 %v809, %v808
        %v867 = vpack.c.b16 %v811, %v810
        %v868 = vpack.c.b16 %v813, %v812
        %v869 = vpack.c.b16 %v815, %v814
        %v870 = vpack.c.b16 %v817, %v816
        %v871 = vpack.c.b16 %v819, %v818
        %v872 = vpack.c.b16 %v821, %v820
        %v873 = vpack.c.b16 %v823, %v822
        %v874 = vpack.c.b16 %v825, %v824
        %v875 = vpack.c.b16 %v827, %v826
        %v876 = vpack.c.b16 %v829, %v828
        %v877 = vpack.c.b16 %v831, %v830
        %v878 = vpack.c.b16 %v833, %v832
        %v879 = vpack.c.b16 %v835, %v834
        %v880 = vpack.c.b16 %v837, %v836
        %v881 = vpack.c.b16 %v839, %v838
        %v882 = vpack.c.b16 %v841, %v840
        %v883 = vpack.c.b16 %v843, %v842
        %v884 = vpack.c.b16 %v845, %v844
        %v885 = vpack.c.b16 %v847, %v846
        %v886 = vpack.c.b16 %v849, %v848
        %v887 = vpack.c.b16 %v851, %v850
        %v888 = vpack.c.b16 %v853, %v852
        %v889 = vpack.c.b16 %v855, %v854
        %v890 = vpack.c.b16 %v857, %v856
        %v891 = vpack.c.b16 %v859, %v858
        %924 = vmatprep.subr.bf16.mxu0 0
        %925 = vmatpush1.bf16.msra.mxu0 %v867
        %926 = vmatprep.subr.bf16.mxu0 0
        %927 = vmatpush1.bf16.msra.mxu0 %v866
        %928 = vmatprep.subr.bf16.mxu0 0
        %929 = vmatpush1.bf16.msra.mxu0 %v865
        %930 = vmatprep.subr.bf16.mxu0 0
        %931 = vmatpush1.bf16.msra.mxu0 %v864
        %932 = vmatprep.subr.bf16.mxu0 0
        %933 = vmatpush1.bf16.msra.mxu0 %v863
        %934 = vmatprep.subr.bf16.mxu0 0
        %935 = vmatpush1.bf16.msra.mxu0 %v862
        %936 = vmatprep.subr.bf16.mxu0 0
        %937 = vmatpush1.bf16.msra.mxu0 %v861
        %938 = vmatprep.subr.bf16.mxu0 0
        %939 = vmatpush1.bf16.msra.mxu0 %v860
        %940 = vmatprep.subr.bf16.mxu0 0
        %941 = vmatpush2.bf16.msra.mxu0 %v875
        %942 = vmatprep.subr.bf16.mxu0 0
        %943 = vmatpush2.bf16.msra.mxu0 %v874
        %944 = vmatprep.subr.bf16.mxu0 0
        %945 = vmatpush2.bf16.msra.mxu0 %v873
        %946 = vmatprep.subr.bf16.mxu0 0
        %947 = vmatpush2.bf16.msra.mxu0 %v872
        %948 = vmatprep.subr.bf16.mxu0 0
        %949 = vmatpush2.bf16.msra.mxu0 %v871
        %950 = vmatprep.subr.bf16.mxu0 0
        %951 = vmatpush2.bf16.msra.mxu0 %v870
        %952 = vmatprep.subr.bf16.mxu0 0
        %953 = vmatpush2.bf16.msra.mxu0 %v869
        %954 = vmatprep.subr.bf16.mxu0 0
        %955 = vmatpush2.bf16.msra.mxu0 %v868
        %956 = vmatprep.mubr.bf16.mxu0 %v658
        %957 = vmatmul.mubr.bf16.gmra.mxu0 %v657
        %v958 = vpop.f32.mrf.mxu0
        %v959 = vadd.f32 %v730, %v958
        %v960 = vpop.f32.mrf.mxu0
        %v961 = vpop.f32.mrf.mxu0
        %v962 = vpop.f32.mrf.mxu0
        %963 = vdwg.mxu0
        %964 = vmatprep.subr.bf16.mxu0 0
        %965 = vmatpush1.bf16.msra.mxu0 %v883
        %966 = vmatprep.subr.bf16.mxu0 0
        %967 = vmatpush1.bf16.msra.mxu0 %v882
        %968 = vmatprep.subr.bf16.mxu0 0
        %969 = vmatpush1.bf16.msra.mxu0 %v881
        %970 = vmatprep.subr.bf16.mxu0 0
        %971 = vmatpush1.bf16.msra.mxu0 %v880
        %972 = vmatprep.subr.bf16.mxu0 0
        %973 = vmatpush1.bf16.msra.mxu0 %v879
        %974 = vmatprep.subr.bf16.mxu0 0
        %975 = vmatpush1.bf16.msra.mxu0 %v878
        %976 = vmatprep.subr.bf16.mxu0 0
        %977 = vmatpush1.bf16.msra.mxu0 %v877
        %978 = vmatprep.subr.bf16.mxu0 0
        %979 = vmatpush1.bf16.msra.mxu0 %v876
        %980 = vmatprep.subr.bf16.mxu0 0
        %981 = vmatpush2.bf16.msra.mxu0 %v891
        %982 = vmatprep.subr.bf16.mxu0 0
        %983 = vmatpush2.bf16.msra.mxu0 %v890
        %984 = vmatprep.subr.bf16.mxu0 0
        %985 = vmatpush2.bf16.msra.mxu0 %v889
        %986 = vmatprep.subr.bf16.mxu0 0
        %987 = vmatpush2.bf16.msra.mxu0 %v888
        %988 = vmatprep.subr.bf16.mxu0 0
        %989 = vmatpush2.bf16.msra.mxu0 %v887
        %990 = vmatprep.subr.bf16.mxu0 0
        %991 = vmatpush2.bf16.msra.mxu0 %v886
        %992 = vmatprep.subr.bf16.mxu0 0
        %993 = vmatpush2.bf16.msra.mxu0 %v885
        %994 = vmatprep.subr.bf16.mxu0 0
        %995 = vmatpush2.bf16.msra.mxu0 %v884
        %996 = vmatprep.mubr.bf16.mxu0 %v660
        %997 = vmatmul.mubr.bf16.gmra.mxu0 %v659
        %v998 = vpop.f32.mrf.mxu0
        %v999 = vadd.f32 %v959, %v998
        %v1000 = vpop.f32.mrf.mxu0
        %v1001 = vpop.f32.mrf.mxu0
        %v1002 = vpop.f32.mrf.mxu0
        %1003 = vdwg.mxu0
        %v1004 = vld [vmem:[#allocation9] sm:$0xff]
        %v1005 = vld [vmem:[#allocation9 + $0x8] sm:$0xff]
        %v1006 = vld [vmem:[#allocation9 + $0x10] sm:$0xff]
        %v1007 = vld [vmem:[#allocation9 + $0x18] sm:$0xff]
        %v1008 = vld [vmem:[#allocation9 + $0x20] sm:$0xff]
        %v1009 = vld [vmem:[#allocation9 + $0x28] sm:$0xff]
        %v1010 = vld [vmem:[#allocation9 + $0x30] sm:$0xff]
        %v1011 = vld [vmem:[#allocation9 + $0x38] sm:$0xff]
        %v1012 = vld [vmem:[%s5] sm:$0xf]
        %v1014 = vlaneseq
        %v1015 = vshrl.u32 %v1014, 7
        %v1016 = vsub.s32 0, %v1015
        %v1017 = vrot.slane %v1012, %v1016
        %v1018 = vlaneseq
        %v1019 = vshrl.u32 %v1018, 7
        %v1020 = vsub.s32 1, %v1019
        %v1021 = vrot.slane %v1012, %v1020
        %v1022 = vlaneseq
        %v1023 = vshrl.u32 %v1022, 7
        %v1024 = vsub.s32 2, %v1023
        %v1025 = vrot.slane %v1012, %v1024
        %v1026 = vlaneseq
        %v1027 = vshrl.u32 %v1026, 7
        %v1028 = vsub.s32 3, %v1027
        %v1029 = vrot.slane %v1012, %v1028
        %v1042 = vunpack.c.l.b16 %v1004
        %v1043 = vunpack.c.h.b16 %v1004
        %v1044 = vunpack.c.l.b16 %v1005
        %v1045 = vunpack.c.h.b16 %v1005
        %v1046 = vunpack.c.l.b16 %v1006
        %v1047 = vunpack.c.h.b16 %v1006
        %v1048 = vunpack.c.l.b16 %v1007
        %v1049 = vunpack.c.h.b16 %v1007
        %v1050 = vunpack.c.l.b16 %v1008
        %v1051 = vunpack.c.h.b16 %v1008
        %v1052 = vunpack.c.l.b16 %v1009
        %v1053 = vunpack.c.h.b16 %v1009
        %v1054 = vunpack.c.l.b16 %v1010
        %v1055 = vunpack.c.h.b16 %v1010
        %v1056 = vunpack.c.l.b16 %v1011
        %v1057 = vunpack.c.h.b16 %v1011
        %v1058 = vpack.c.b16 %v1046, %v1042
        %v1059 = vpack.c.b16 %v1047, %v1043
        %v1060 = vpack.c.b16 %v1048, %v1044
        %v1061 = vpack.c.b16 %v1049, %v1045
        %v1062 = vpack.c.b16 %v1054, %v1050
        %v1063 = vpack.c.b16 %v1055, %v1051
        %v1064 = vpack.c.b16 %v1056, %v1052
        %v1065 = vpack.c.b16 %v1057, %v1053
        %1074 = vmatprep.subr.bf16.mxu0 0
        %1075 = vmatpush1.bf16.msra.mxu0 0
        %1076 = vmatprep.subr.bf16.mxu0 0
        %1077 = vmatpush1.bf16.msra.mxu0 0
        %1078 = vmatprep.subr.bf16.mxu0 0
        %1079 = vmatpush1.bf16.msra.mxu0 0
        %1080 = vmatprep.subr.bf16.mxu0 0
        %1081 = vmatpush1.bf16.msra.mxu0 0
        %1082 = vmatprep.subr.bf16.mxu0 0
        %1083 = vmatpush1.bf16.msra.mxu0 0
        %1084 = vmatprep.subr.bf16.mxu0 0
        %1085 = vmatpush1.bf16.msra.mxu0 0
        %1086 = vmatprep.subr.bf16.mxu0 %v1063
        %1087 = vmatpush1.bf16.msra.mxu0 %v1062
        %1088 = vmatprep.subr.bf16.mxu0 %v1059
        %1089 = vmatpush1.bf16.msra.mxu0 %v1058
        %1090 = vmatprep.subr.bf16.mxu0 0
        %1091 = vmatpush2.bf16.msra.mxu0 0
        %1092 = vmatprep.subr.bf16.mxu0 0
        %1093 = vmatpush2.bf16.msra.mxu0 0
        %1094 = vmatprep.subr.bf16.mxu0 0
        %1095 = vmatpush2.bf16.msra.mxu0 0
        %1096 = vmatprep.subr.bf16.mxu0 0
        %1097 = vmatpush2.bf16.msra.mxu0 0
        %1098 = vmatprep.subr.bf16.mxu0 0
        %1099 = vmatpush2.bf16.msra.mxu0 0
        %1100 = vmatprep.subr.bf16.mxu0 0
        %1101 = vmatpush2.bf16.msra.mxu0 0
        %1102 = vmatprep.subr.bf16.mxu0 0
        %1103 = vmatpush2.bf16.msra.mxu0 0
        %1104 = vmatprep.subr.bf16.mxu0 0
        %1105 = vmatpush2.bf16.msra.mxu0 0
        %1106 = vmatprep.mubr.bf16.mxu0 0
        %1107 = vmatmul.mubr.bf16.gmra.mxu0 %v569
        %v1108 = vpop.f32.mrf.mxu0
        %v1109 = vadd.f32 %v1017, %v1108
        %v1110 = vpop.f32.mrf.mxu0
        %v1111 = vadd.f32 %v1021, %v1110
        %v1112 = vpop.f32.mrf.mxu0
        %v1113 = vpop.f32.mrf.mxu0
        %1114 = vdwg.mxu0
        %1115 = vmatprep.subr.bf16.mxu0 0
        %1116 = vmatpush1.bf16.msra.mxu0 0
        %1117 = vmatprep.subr.bf16.mxu0 0
        %1118 = vmatpush1.bf16.msra.mxu0 0
        %1119 = vmatprep.subr.bf16.mxu0 0
        %1120 = vmatpush1.bf16.msra.mxu0 0
        %1121 = vmatprep.subr.bf16.mxu0 0
        %1122 = vmatpush1.bf16.msra.mxu0 0
        %1123 = vmatprep.subr.bf16.mxu0 0
        %1124 = vmatpush1.bf16.msra.mxu0 0
        %1125 = vmatprep.subr.bf16.mxu0 0
        %1126 = vmatpush1.bf16.msra.mxu0 0
        %1127 = vmatprep.subr.bf16.mxu0 %v1065
        %1128 = vmatpush1.bf16.msra.mxu0 %v1064
        %1129 = vmatprep.subr.bf16.mxu0 %v1061
        %1130 = vmatpush1.bf16.msra.mxu0 %v1060
        %1131 = vmatprep.subr.bf16.mxu0 0
        %1132 = vmatpush2.bf16.msra.mxu0 0
        %1133 = vmatprep.subr.bf16.mxu0 0
        %1134 = vmatpush2.bf16.msra.mxu0 0
        %1135 = vmatprep.subr.bf16.mxu0 0
        %1136 = vmatpush2.bf16.msra.mxu0 0
        %1137 = vmatprep.subr.bf16.mxu0 0
        %1138 = vmatpush2.bf16.msra.mxu0 0
        %1139 = vmatprep.subr.bf16.mxu0 0
        %1140 = vmatpush2.bf16.msra.mxu0 0
        %1141 = vmatprep.subr.bf16.mxu0 0
        %1142 = vmatpush2.bf16.msra.mxu0 0
        %1143 = vmatprep.subr.bf16.mxu0 0
        %1144 = vmatpush2.bf16.msra.mxu0 0
        %1145 = vmatprep.subr.bf16.mxu0 0
        %1146 = vmatpush2.bf16.msra.mxu0 0
        %1147 = vmatprep.mubr.bf16.mxu0 0
        %1148 = vmatmul.mubr.bf16.gmra.mxu0 %v569
        %v1149 = vpop.f32.mrf.mxu0
        %v1150 = vadd.f32 %v1025, %v1149
        %v1151 = vpop.f32.mrf.mxu0
        %v1152 = vadd.f32 %v1029, %v1151
        %v1153 = vpop.f32.mrf.mxu0
        %v1154 = vpop.f32.mrf.mxu0
        %1155 = vdwg.mxu0
        %v1156 = vmax.f32 %v1109, 0.0
        %v1157 = vmax.f32 %v1111, 0.0
        %v1158 = vmax.f32 %v1150, 0.0
        %v1159 = vmax.f32 %v1152, 0.0
        %v1160 = vpack.c.bf16 %v1156, %v1156
        %v1161 = vpack.c.bf16 %v1157, %v1157
        %v1162 = vpack.c.bf16 %v1158, %v1158
        %v1163 = vpack.c.bf16 %v1159, %v1159
        %v1164 = vld [vmem:[#allocation12] sm:$0xf]
        %v1165 = vld [vmem:[#allocation12 + $0x4] sm:$0xf]
        %v1166 = vld [vmem:[#allocation12 + $0x8] sm:$0xf]
        %v1167 = vld [vmem:[#allocation12 + $0xc] sm:$0xf]
        %v1168 = vld [vmem:[#allocation12 + $0x10] sm:$0xf]
        %v1169 = vld [vmem:[#allocation12 + $0x14] sm:$0xf]
        %v1170 = vld [vmem:[#allocation12 + $0x18] sm:$0xf]
        %v1171 = vld [vmem:[#allocation12 + $0x1c] sm:$0xf]
        %v1172 = vld [vmem:[#allocation12 + $0x20] sm:$0xf]
        %v1173 = vld [vmem:[#allocation12 + $0x24] sm:$0xf]
        %v1174 = vld [vmem:[#allocation12 + $0x28] sm:$0xf]
        %v1175 = vld [vmem:[#allocation12 + $0x2c] sm:$0xf]
        %v1176 = vld [vmem:[#allocation12 + $0x30] sm:$0xf]
        %v1177 = vld [vmem:[#allocation12 + $0x34] sm:$0xf]
        %v1178 = vld [vmem:[#allocation12 + $0x38] sm:$0xf]
        %v1179 = vld [vmem:[#allocation12 + $0x3c] sm:$0xf]
        %v1180 = vld [vmem:[#allocation12 + $0x40] sm:$0xf]
        %v1181 = vld [vmem:[#allocation12 + $0x44] sm:$0xf]
        %v1182 = vld [vmem:[#allocation12 + $0x48] sm:$0xf]
        %v1183 = vld [vmem:[#allocation12 + $0x4c] sm:$0xf]
        %v1184 = vld [vmem:[#allocation12 + $0x50] sm:$0xf]
        %v1185 = vld [vmem:[#allocation12 + $0x54] sm:$0xf]
        %v1186 = vld [vmem:[#allocation12 + $0x58] sm:$0xf]
        %v1187 = vld [vmem:[#allocation12 + $0x5c] sm:$0xf]
        %v1188 = vld [vmem:[#allocation12 + $0x60] sm:$0xf]
        %v1189 = vld [vmem:[#allocation12 + $0x64] sm:$0xf]
        %v1190 = vld [vmem:[#allocation12 + $0x68] sm:$0xf]
        %v1191 = vld [vmem:[#allocation12 + $0x6c] sm:$0xf]
        %v1192 = vld [vmem:[#allocation12 + $0x70] sm:$0xf]
        %v1193 = vld [vmem:[#allocation12 + $0x74] sm:$0xf]
        %v1194 = vld [vmem:[#allocation12 + $0x78] sm:$0xf]
        %v1195 = vld [vmem:[#allocation12 + $0x7c] sm:$0xf]
        %v1196 = vld [vmem:[#allocation12 + $0x80] sm:$0xf]
        %v1197 = vld [vmem:[#allocation12 + $0x84] sm:$0xf]
        %v1198 = vld [vmem:[#allocation12 + $0x88] sm:$0xf]
        %v1199 = vld [vmem:[#allocation12 + $0x8c] sm:$0xf]
        %v1200 = vld [vmem:[#allocation12 + $0x90] sm:$0xf]
        %v1201 = vld [vmem:[#allocation12 + $0x94] sm:$0xf]
        %v1202 = vld [vmem:[#allocation12 + $0x98] sm:$0xf]
        %v1203 = vld [vmem:[#allocation12 + $0x9c] sm:$0xf]
        %v1204 = vld [vmem:[#allocation12 + $0xa0] sm:$0xf]
        %v1205 = vld [vmem:[#allocation12 + $0xa4] sm:$0xf]
        %v1206 = vld [vmem:[#allocation12 + $0xa8] sm:$0xf]
        %v1207 = vld [vmem:[#allocation12 + $0xac] sm:$0xf]
        %v1208 = vld [vmem:[#allocation12 + $0xb0] sm:$0xf]
        %v1209 = vld [vmem:[#allocation12 + $0xb4] sm:$0xf]
        %v1210 = vld [vmem:[#allocation12 + $0xb8] sm:$0xf]
        %v1211 = vld [vmem:[#allocation12 + $0xbc] sm:$0xf]
        %v1212 = vld [vmem:[#allocation12 + $0xc0] sm:$0xf]
        %v1213 = vld [vmem:[#allocation12 + $0xc4] sm:$0xf]
        %v1214 = vld [vmem:[#allocation12 + $0xc8] sm:$0xf]
        %v1215 = vld [vmem:[#allocation12 + $0xcc] sm:$0xf]
        %v1216 = vld [vmem:[#allocation12 + $0xd0] sm:$0xf]
        %v1217 = vld [vmem:[#allocation12 + $0xd4] sm:$0xf]
        %v1218 = vld [vmem:[#allocation12 + $0xd8] sm:$0xf]
        %v1219 = vld [vmem:[#allocation12 + $0xdc] sm:$0xf]
        %v1220 = vld [vmem:[#allocation12 + $0xe0] sm:$0xf]
        %v1221 = vld [vmem:[#allocation12 + $0xe4] sm:$0xf]
        %v1222 = vld [vmem:[#allocation12 + $0xe8] sm:$0xf]
        %v1223 = vld [vmem:[#allocation12 + $0xec] sm:$0xf]
        %v1224 = vld [vmem:[#allocation12 + $0xf0] sm:$0xf]
        %v1225 = vld [vmem:[#allocation12 + $0xf4] sm:$0xf]
        %v1226 = vld [vmem:[#allocation12 + $0xf8] sm:$0xf]
        %v1227 = vld [vmem:[#allocation12 + $0xfc] sm:$0xf]
        %v1292 = vunpack.c.l.b16 %v1164
        %v1293 = vunpack.c.l.b16 %v1165
        %v1294 = vunpack.c.l.b16 %v1166
        %v1295 = vunpack.c.l.b16 %v1167
        %v1296 = vunpack.c.l.b16 %v1168
        %v1297 = vunpack.c.l.b16 %v1169
        %v1298 = vunpack.c.l.b16 %v1170
        %v1299 = vunpack.c.l.b16 %v1171
        %v1300 = vunpack.c.l.b16 %v1172
        %v1301 = vunpack.c.l.b16 %v1173
        %v1302 = vunpack.c.l.b16 %v1174
        %v1303 = vunpack.c.l.b16 %v1175
        %v1304 = vunpack.c.l.b16 %v1176
        %v1305 = vunpack.c.l.b16 %v1177
        %v1306 = vunpack.c.l.b16 %v1178
        %v1307 = vunpack.c.l.b16 %v1179
        %v1308 = vunpack.c.l.b16 %v1180
        %v1309 = vunpack.c.l.b16 %v1181
        %v1310 = vunpack.c.l.b16 %v1182
        %v1311 = vunpack.c.l.b16 %v1183
        %v1312 = vunpack.c.l.b16 %v1184
        %v1313 = vunpack.c.l.b16 %v1185
        %v1314 = vunpack.c.l.b16 %v1186
        %v1315 = vunpack.c.l.b16 %v1187
        %v1316 = vunpack.c.l.b16 %v1188
        %v1317 = vunpack.c.l.b16 %v1189
        %v1318 = vunpack.c.l.b16 %v1190
        %v1319 = vunpack.c.l.b16 %v1191
        %v1320 = vunpack.c.l.b16 %v1192
        %v1321 = vunpack.c.l.b16 %v1193
        %v1322 = vunpack.c.l.b16 %v1194
        %v1323 = vunpack.c.l.b16 %v1195
        %v1324 = vunpack.c.l.b16 %v1196
        %v1325 = vunpack.c.l.b16 %v1197
        %v1326 = vunpack.c.l.b16 %v1198
        %v1327 = vunpack.c.l.b16 %v1199
        %v1328 = vunpack.c.l.b16 %v1200
        %v1329 = vunpack.c.l.b16 %v1201
        %v1330 = vunpack.c.l.b16 %v1202
        %v1331 = vunpack.c.l.b16 %v1203
        %v1332 = vunpack.c.l.b16 %v1204
        %v1333 = vunpack.c.l.b16 %v1205
        %v1334 = vunpack.c.l.b16 %v1206
        %v1335 = vunpack.c.l.b16 %v1207
        %v1336 = vunpack.c.l.b16 %v1208
        %v1337 = vunpack.c.l.b16 %v1209
        %v1338 = vunpack.c.l.b16 %v1210
        %v1339 = vunpack.c.l.b16 %v1211
        %v1340 = vunpack.c.l.b16 %v1212
        %v1341 = vunpack.c.l.b16 %v1213
        %v1342 = vunpack.c.l.b16 %v1214
        %v1343 = vunpack.c.l.b16 %v1215
        %v1344 = vunpack.c.l.b16 %v1216
        %v1345 = vunpack.c.l.b16 %v1217
        %v1346 = vunpack.c.l.b16 %v1218
        %v1347 = vunpack.c.l.b16 %v1219
        %v1348 = vunpack.c.l.b16 %v1220
        %v1349 = vunpack.c.l.b16 %v1221
        %v1350 = vunpack.c.l.b16 %v1222
        %v1351 = vunpack.c.l.b16 %v1223
        %v1352 = vunpack.c.l.b16 %v1224
        %v1353 = vunpack.c.l.b16 %v1225
        %v1354 = vunpack.c.l.b16 %v1226
        %v1355 = vunpack.c.l.b16 %v1227
        %v1356 = vpack.c.b16 %v1293, %v1292
        %v1357 = vpack.c.b16 %v1295, %v1294
        %v1358 = vpack.c.b16 %v1297, %v1296
        %v1359 = vpack.c.b16 %v1299, %v1298
        %v1360 = vpack.c.b16 %v1301, %v1300
        %v1361 = vpack.c.b16 %v1303, %v1302
        %v1362 = vpack.c.b16 %v1305, %v1304
        %v1363 = vpack.c.b16 %v1307, %v1306
        %v1364 = vpack.c.b16 %v1309, %v1308
        %v1365 = vpack.c.b16 %v1311, %v1310
        %v1366 = vpack.c.b16 %v1313, %v1312
        %v1367 = vpack.c.b16 %v1315, %v1314
        %v1368 = vpack.c.b16 %v1317, %v1316
        %v1369 = vpack.c.b16 %v1319, %v1318
        %v1370 = vpack.c.b16 %v1321, %v1320
        %v1371 = vpack.c.b16 %v1323, %v1322
        %v1372 = vpack.c.b16 %v1325, %v1324
        %v1373 = vpack.c.b16 %v1327, %v1326
        %v1374 = vpack.c.b16 %v1329, %v1328
        %v1375 = vpack.c.b16 %v1331, %v1330
        %v1376 = vpack.c.b16 %v1333, %v1332
        %v1377 = vpack.c.b16 %v1335, %v1334
        %v1378 = vpack.c.b16 %v1337, %v1336
        %v1379 = vpack.c.b16 %v1339, %v1338
        %v1380 = vpack.c.b16 %v1341, %v1340
        %v1381 = vpack.c.b16 %v1343, %v1342
        %v1382 = vpack.c.b16 %v1345, %v1344
        %v1383 = vpack.c.b16 %v1347, %v1346
        %v1384 = vpack.c.b16 %v1349, %v1348
        %v1385 = vpack.c.b16 %v1351, %v1350
        %v1386 = vpack.c.b16 %v1353, %v1352
        %v1387 = vpack.c.b16 %v1355, %v1354
        %1420 = vmatprep.subr.bf16.mxu0 0
        %1421 = vmatpush1.bf16.msra.mxu0 %v1363
        %1422 = vmatprep.subr.bf16.mxu0 0
        %1423 = vmatpush1.bf16.msra.mxu0 %v1362
        %1424 = vmatprep.subr.bf16.mxu0 0
        %1425 = vmatpush1.bf16.msra.mxu0 %v1361
        %1426 = vmatprep.subr.bf16.mxu0 0
        %1427 = vmatpush1.bf16.msra.mxu0 %v1360
        %1428 = vmatprep.subr.bf16.mxu0 0
        %1429 = vmatpush1.bf16.msra.mxu0 %v1359
        %1430 = vmatprep.subr.bf16.mxu0 0
        %1431 = vmatpush1.bf16.msra.mxu0 %v1358
        %1432 = vmatprep.subr.bf16.mxu0 0
        %1433 = vmatpush1.bf16.msra.mxu0 %v1357
        %1434 = vmatprep.subr.bf16.mxu0 0
        %1435 = vmatpush1.bf16.msra.mxu0 %v1356
        %1436 = vmatprep.subr.bf16.mxu0 0
        %1437 = vmatpush2.bf16.msra.mxu0 %v1371
        %1438 = vmatprep.subr.bf16.mxu0 0
        %1439 = vmatpush2.bf16.msra.mxu0 %v1370
        %1440 = vmatprep.subr.bf16.mxu0 0
        %1441 = vmatpush2.bf16.msra.mxu0 %v1369
        %1442 = vmatprep.subr.bf16.mxu0 0
        %1443 = vmatpush2.bf16.msra.mxu0 %v1368
        %1444 = vmatprep.subr.bf16.mxu0 0
        %1445 = vmatpush2.bf16.msra.mxu0 %v1367
        %1446 = vmatprep.subr.bf16.mxu0 0
        %1447 = vmatpush2.bf16.msra.mxu0 %v1366
        %1448 = vmatprep.subr.bf16.mxu0 0
        %1449 = vmatpush2.bf16.msra.mxu0 %v1365
        %1450 = vmatprep.subr.bf16.mxu0 0
        %1451 = vmatpush2.bf16.msra.mxu0 %v1364
        %1452 = vmatprep.mubr.bf16.mxu0 %v1161
        %1453 = vmatmul.mubr.bf16.gmra.mxu0 %v1160
        %v1454 = vpop.f32.mrf.mxu0
        %v1455 = vadd.f32 0.0, %v1454
        %v1456 = vpop.f32.mrf.mxu0
        %v1457 = vpop.f32.mrf.mxu0
        %v1458 = vpop.f32.mrf.mxu0
        %1459 = vdwg.mxu0
        %1460 = vmatprep.subr.bf16.mxu0 0
        %1461 = vmatpush1.bf16.msra.mxu0 %v1379
        %1462 = vmatprep.subr.bf16.mxu0 0
        %1463 = vmatpush1.bf16.msra.mxu0 %v1378
        %1464 = vmatprep.subr.bf16.mxu0 0
        %1465 = vmatpush1.bf16.msra.mxu0 %v1377
        %1466 = vmatprep.subr.bf16.mxu0 0
        %1467 = vmatpush1.bf16.msra.mxu0 %v1376
        %1468 = vmatprep.subr.bf16.mxu0 0
        %1469 = vmatpush1.bf16.msra.mxu0 %v1375
        %1470 = vmatprep.subr.bf16.mxu0 0
        %1471 = vmatpush1.bf16.msra.mxu0 %v1374
        %1472 = vmatprep.subr.bf16.mxu0 0
        %1473 = vmatpush1.bf16.msra.mxu0 %v1373
        %1474 = vmatprep.subr.bf16.mxu0 0
        %1475 = vmatpush1.bf16.msra.mxu0 %v1372
        %1476 = vmatprep.subr.bf16.mxu0 0
        %1477 = vmatpush2.bf16.msra.mxu0 %v1387
        %1478 = vmatprep.subr.bf16.mxu0 0
        %1479 = vmatpush2.bf16.msra.mxu0 %v1386
        %1480 = vmatprep.subr.bf16.mxu0 0
        %1481 = vmatpush2.bf16.msra.mxu0 %v1385
        %1482 = vmatprep.subr.bf16.mxu0 0
        %1483 = vmatpush2.bf16.msra.mxu0 %v1384
        %1484 = vmatprep.subr.bf16.mxu0 0
        %1485 = vmatpush2.bf16.msra.mxu0 %v1383
        %1486 = vmatprep.subr.bf16.mxu0 0
        %1487 = vmatpush2.bf16.msra.mxu0 %v1382
        %1488 = vmatprep.subr.bf16.mxu0 0
        %1489 = vmatpush2.bf16.msra.mxu0 %v1381
        %1490 = vmatprep.subr.bf16.mxu0 0
        %1491 = vmatpush2.bf16.msra.mxu0 %v1380
        %1492 = vmatprep.mubr.bf16.mxu0 %v1163
        %1493 = vmatmul.mubr.bf16.gmra.mxu0 %v1162
        %v1494 = vpop.f32.mrf.mxu0
        %v1495 = vadd.f32 %v1455, %v1494
        %v1496 = vpop.f32.mrf.mxu0
        %v1497 = vpop.f32.mrf.mxu0
        %v1498 = vpop.f32.mrf.mxu0
        %1499 = vdwg.mxu0
        %v1500 = vld [vmem:[#allocation2] sm:$0x1]
        %v1502 = vlaneseq
        %v1503 = vshrl.u32 %v1502, 7
        %v1504 = vsub.s32 0, %v1503
        %v1505 = vrot.slane %v1500, %v1504
        %v1507 = vadd.f32 %v1495, %v1505
        %1508 = vadd.xlane.f32.xlu0 %v999
        %v1509 = vpop.xlane.xlu0 %1508
        %v1510 = vmul.f32 %v1509, 0.25
        %1512 = vset.pattern.permute.xlu0 0
        %1513 = vperm.xlu0 %1512, %v1507
        %v1514 = vpop.permute.xlu0 %1513
        %v1516 = vadd.f32 %v1514, %v999
        %v1517 = vsub.f32 %v1516, %v1510
        %1518 = vst [vmem:[%s485] sm:$0xff] %v1517
        %s1519 = sand.u32 %s278, 1
        %s1520 = scalar_lea.sflag [#allocation5], %s1519
        %s1521 = sand.u32 %s278, 1
        %s1522 = smul.addr %s1521, 8
        %s1523 = scalar_lea.vmem [#allocation14], %s1522
        // Predicated region
        $region85: #{tpu_custom_call.1} parent=59 // pred_check
          %p1524 = pneg %p288
        $region86: #{tpu_custom_call.1} parent=59 // pred_check_branch
          %1526 = sbr.rel (%p1524) target = $region88
        $region87: #{tpu_custom_call.1} parent=59 // pred_region
          %s1528 = ssub.s32 128, 128
          %1529 = vsyncadd %s1520, %s1528
          %s1530 = sadd.s32 %s39, %s38
          %s1531 = smul.addr %s1530, 128
          %s1532 = scalar_lea.hbm %s10, %s1531
          %s1534 = sshll.u32 %s1523, 4
          %s1535 = int_to_ptr.vmem [resolvable:$true] %s1534
          %1537 = dma.vmem_to_hbm [thread:$0]  %s1535, 128, %s1532, %s1520
        $region88: #{tpu_custom_call.1} parent=59 // pred_fallthru
          _
      $region60: #{tpu_custom_call.1} parent=5 // pred_fallthru
        _
      %p1538 = scmp.le.s32.totalorder 2, %s29
      // Predicated region
      $region89: #{tpu_custom_call.1} parent=5 // pred_check
        %p1539 = pneg %p1538
      $region90: #{tpu_custom_call.1} parent=5 // pred_check_branch
        %1541 = sbr.rel (%p1539) target = $region92
      $region91: #{tpu_custom_call.1} parent=5 // pred_region
        %s1542 = ssub.s32 %s29, 2
        // Predicated region
        $region93: #{tpu_custom_call.1} parent=91 // pred_check
          %p1543 = pneg %p294
        $region94: #{tpu_custom_call.1} parent=91 // pred_check_branch
          %1545 = sbr.rel (%p1543) target = $region96
        $region95: #{tpu_custom_call.1} parent=91 // pred_region
          %s1546 = sand.u32 %s279, 1
          %s1547 = scalar_lea.sflag [#allocation5], %s1546
          %s1548 = sand.u32 %s279, 1
          %s1549 = smul.addr %s1548, 8
          %s1550 = scalar_lea.vmem [#allocation14], %s1549
          %1551 = dma.done %s1547, 128
        $region96: #{tpu_custom_call.1} parent=91 // pred_fallthru
          _
      $region92: #{tpu_custom_call.1} parent=5 // pred_fallthru
        _
    $region6: #{tpu_custom_call.1} parent=1 // loop_footer
      %s33 = sadd.s32 1, %s29
    $region7: #{tpu_custom_call.1} parent=1 // loop_footer_branch
      %28 = sbr.rel target = $region3
    $region8: #{tpu_custom_call.1} parent=1 // loop_exit
      _
    %1552 = vsyncpa [#allocation4], 1
    %s1553 = scalar_lea.sflag [#allocation4], 1
    %1554 = vsyncpa %s1553, 1
    %1555 = vsyncpa [#allocation7], 1
    %s1556 = scalar_lea.sflag [#allocation7], 1
    %1557 = vsyncpa %s1556, 1
    %1558 = vsyncpa [#allocation10], 1
    %1559 = vsyncpa [#allocation13], 1
    %1560 = vsyncpa [#allocation5], 1
    %s1561 = scalar_lea.sflag [#allocation5], 1
    %1562 = vsyncpa %s1561, 1

</llo_original>
